<compile_context>
chip_gen: v7x
topology: tpu7x:2x2x1
jax: 0.10.0
libtpu: 0.0.40
codegen_flags: <defaults>
</compile_context>

<pallas_src>
import functools

import numpy as np
import jax
import jax.numpy as jnp
from jax.experimental import pallas as pl
from jax.experimental.pallas import tpu as pltpu


# ----------------------------------------------------------------------------
# Hardware-aware VMEM sizing
# ----------------------------------------------------------------------------

def _vmem_capacity_bytes():
    try:
        return int(pltpu.get_tpu_info().vmem_capacity_bytes)
    except Exception:
        pass
    try:
        kind = jax.devices()[0].device_kind.lower()
        if 'v7' in kind or '7x' in kind:
            return 64 * 1024 * 1024
        return 128 * 1024 * 1024
    except Exception:
        return 64 * 1024 * 1024          # conservative default


def _compute_dtype(io_dtype):
    """bf16 compute only where the VPU has bf16 ALUs (v6e/v7x); else f32."""
    if jnp.dtype(io_dtype) != jnp.dtype(jnp.bfloat16):
        return jnp.float32
    try:
        kind = jax.devices()[0].device_kind.lower()
    except Exception:
        kind = ''
    if ('v6' in kind) or ('v7' in kind) or ('7x' in kind):
        return jnp.bfloat16
    return jnp.float32


def _step_vmem_bytes(th, w, c, io_itemsize, comp_itemsize, needs_conv):
    """VMEM footprint of one grid step (double-buffered blocks + live temps)."""
    blk = th * w * c
    io = 2 * (blk + 4 * blk) * io_itemsize        # 2x (input block + 4x output block)
    io += 2 * 2 * w * c * io_itemsize             # 2x halo block (2 rows)
    live = (9 if needs_conv else 1) * blk * comp_itemsize   # x, x_l, x_r, h_e, h_o, store temps
    return io + live


def _pick_h_tile(n, h, w, c, io_itemsize, comp_itemsize, needs_conv, budget,
                 min_steps=2):
    """Largest divisor of h whose grid step fits the budget; prefer >=2 steps."""
    divs = [d for d in range(h, 0, -1) if h % d == 0]
    th = next((d for d in divs
               if _step_vmem_bytes(d, w, c, io_itemsize, comp_itemsize,
                                   needs_conv) <= budget), 1)
    # TODO(synk): a single-row block that still exceeds the budget (enormous
    # W*C) would additionally need channel tiling; not needed for ESANet shapes.
    if n * (h // th) < min_steps:
        smaller = [d for d in divs
                   if h // d >= min_steps and
                   _step_vmem_bytes(d, w, c, io_itemsize, comp_itemsize,
                                    needs_conv) <= budget]
        if smaller:
            th = smaller[0]   # largest divisor that still gives >=2 grid steps
    return th


# ----------------------------------------------------------------------------
# Kernels
# ----------------------------------------------------------------------------

def _upsample_blur_kernel(x_ref, halo_ref, o_ref, *, wcol, wrow,
                          replicate_pad, compute_dtype):
    """Fused nearest-2x upsample + pad + separable depthwise 3x3 blur.

    x_ref:    (1, th, W, C)       input tile
    halo_ref: (1, 1, 2, W, C)     rows just above / below this tile (edge or
                                  zero rows already substituted at the image
                                  border by the wrapper)
    o_ref:    (1, th, 2, W, 2C)   o[0, a, pi, b, pj*C + c] == y[2a+pi, 2b+pj, c]
    """
    cdt = compute_dtype
    odt = o_ref.dtype
    th = x_ref.shape[1]
    C = x_ref.shape[3]

    c0, c12, c01, c2 = wcol        # compile-time Python floats
    r0, r12, r01, r2 = wrow

    x = x_ref[0].astype(cdt)                   # (th, W, C)
    halo = halo_ref[0, 0].astype(cdt)          # (2, W, C): [row above, row below]

    def wedge(v):
        # W-axis boundary: replication pad -> edge value; zero pad -> zeros
        return v if replicate_pad else jnp.zeros_like(v)

    def colpass(rows):                         # (R, W, C) -> even/odd column prefilter
        left = jnp.concatenate([wedge(rows[:, :1]), rows[:, :-1]], axis=1)
        right = jnp.concatenate([rows[:, 1:], wedge(rows[:, -1:])], axis=1)
        return c0 * left + c12 * rows, c01 * rows + c2 * right

    h_e, h_o = colpass(x)                      # (th, W, C) each
    he_h, ho_h = colpass(halo)                 # (2, W, C) each

    # --- boundary output rows (use the halo rows) -----------------------------
    # even output row of local row 0: taps (above, 0)
    o_ref[0, 0, 0, :, :C] = (r0 * he_h[0] + r12 * h_e[0]).astype(odt)
    o_ref[0, 0, 0, :, C:] = (r0 * ho_h[0] + r12 * h_o[0]).astype(odt)
    # odd output row of local row th-1: taps (th-1, below)
    o_ref[0, th - 1, 1, :, :C] = (r01 * h_e[th - 1] + r2 * he_h[1]).astype(odt)
    o_ref[0, th - 1, 1, :, C:] = (r01 * h_o[th - 1] + r2 * ho_h[1]).astype(odt)

    # --- interior output rows: offset slices, no shifted copies ---------------
    if th > 1:
        # even output rows 2a, a in [1, th): taps (a-1, a)
        o_ref[0, 1:, 0, :, :C] = (r0 * h_e[:-1] + r12 * h_e[1:]).astype(odt)
        o_ref[0, 1:, 0, :, C:] = (r0 * h_o[:-1] + r12 * h_o[1:]).astype(odt)
        # odd output rows 2a+1, a in [0, th-1): taps (a, a+1)
        o_ref[0, :-1, 1, :, :C] = (r01 * h_e[:-1] + r2 * h_e[1:]).astype(odt)
        o_ref[0, :-1, 1, :, C:] = (r01 * h_o[:-1] + r2 * h_o[1:]).astype(odt)


def _nearest2x_kernel(x_ref, o_ref):
    """Pure nearest-2x replicate: y[2a+pi, 2b+pj, c] = x[a, b, c] (no FMAs)."""
    # TODO(synk): could be turned into pure strided DMA (memory_space=pl.ANY
    # output + 4 async copies) to drop the 4x VMEM output block entirely.
    x = x_ref[0]                          # (th, W, C), kept in the I/O dtype
    C = x.shape[-1]
    o_ref[0, :, 0, :, :C] = x
    o_ref[0, :, 0, :, C:] = x
    o_ref[0, :, 1, :, :C] = x
    o_ref[0, :, 1, :, C:] = x


# ----------------------------------------------------------------------------
# Module wrapper
# ----------------------------------------------------------------------------

class UpsamplePallas:
    """JAX/Pallas equivalent of ESANet's Upsample(mode, channels) forward."""

    _SEP = (0.25, 0.5, 0.25)   # separable factor of the binomial blur

    def __init__(self, mode, channels=None, data_format='NCHW', h_tile=None):
        assert data_format in ('NCHW', 'NHWC')
        self.mode = mode
        self.data_format = data_format
        self.h_tile = h_tile
        if 'learned-3x3' in mode:
            # Depthwise 3x3 conv initialised to the binomial blur, bias zeroed.
            # TODO(synk): weights after *training* need not stay separable; this
            # forward implements the module's deterministic init (blur, bias=0),
            # so the bias add and the general 9-tap path are dropped.
            assert channels is not None
            self.needs_conv = True
            self.replicate_pad = (mode == 'learned-3x3')   # -zeropad -> False
        elif mode == 'nearest':
            self.needs_conv = False
            self.replicate_pad = True
        elif mode == 'bilinear':
            # For exact 2x scaling, F.interpolate(mode='bilinear',
            # align_corners=False) == nearest-2x + replication-pad + binomial
            # blur (validated against a bilinear reference below).
            self.needs_conv = True
            self.replicate_pad = True
        else:
            # TODO(synk): other F.interpolate modes (e.g. 'bicubic') not implemented.
            raise NotImplementedError(mode)
        self.channels = channels
        f0, f1, f2 = self._SEP
        # (w0, w1+w2, w0+w1, w2) -- compile-time constants, identical per channel
        self._wcomb = (float(f0), float(f1 + f2), float(f0 + f1), float(f2))

    def _build_halo(self, x_nhwc, th, nt, h):
        """(N, nt, 2, W, C): rows just above/below each H-tile (edge/zero at border)."""
        idx_top = jnp.clip(jnp.arange(nt) * th - 1, 0, h - 1)
        idx_bot = jnp.clip(jnp.arange(nt) * th + th, 0, h - 1)
        top = jnp.take(x_nhwc, idx_top, axis=1)     # (N, nt, W, C)
        bot = jnp.take(x_nhwc, idx_bot, axis=1)
        if not self.replicate_pad:                  # zero padding at the image border
            top = top.at[:, 0].set(0)
            bot = bot.at[:, nt - 1].set(0)
        return jnp.stack([top, bot], axis=2)        # (N, nt, 2, W, C)

    def __call__(self, x):
        if self.data_format == 'NCHW':
            n, c, h, w = x.shape
            x_nhwc = jnp.transpose(x, (0, 2, 3, 1))
        else:
            n, h, w, c = x.shape
            x_nhwc = x
        if self.channels is not None:
            assert c == self.channels, (c, self.channels)

        io_size = jnp.dtype(x.dtype).itemsize
        cdt = _compute_dtype(x.dtype)
        comp_size = jnp.dtype(cdt).itemsize

        cap = _vmem_capacity_bytes()
        budget = int(0.42 * cap)      # ~54 MiB on v5e/v6e (128 MiB), ~27 MiB on v7x
        th = self.h_tile or _pick_h_tile(n, h, w, c, io_size, comp_size,
                                         self.needs_conv, budget)
        assert h % th == 0, (h, th)
        nt = h // th

        step = _step_vmem_bytes(th, w, c, io_size, comp_size, self.needs_conv)
        vmem_limit = int(min(0.82 * cap, max(32 * 1024 * 1024, 1.5 * step)))

        compiler_params = pltpu.CompilerParams(
            # N and H-tiles are independent -> shard across v7x's 2 TensorCores.
            dimension_semantics=("parallel", "parallel"),
            vmem_limit_bytes=vmem_limit,
        )

        in_specs = [pl.BlockSpec((1, th, w, c), lambda ni, hi: (ni, hi, 0, 0))]
        out_spec = pl.BlockSpec((1, th, 2, w, 2 * c),
                                lambda ni, hi: (ni, hi, 0, 0, 0))
        out_shape = jax.ShapeDtypeStruct((n, h, 2, w, 2 * c), x.dtype)

        if self.needs_conv:
            halo = self._build_halo(x_nhwc, th, nt, h)
            in_specs.append(pl.BlockSpec((1, 1, 2, w, c),
                                         lambda ni, hi: (ni, hi, 0, 0, 0)))
            kernel = functools.partial(_upsample_blur_kernel,
                                       wcol=self._wcomb, wrow=self._wcomb,
                                       replicate_pad=self.replicate_pad,
                                       compute_dtype=cdt)
            args = (x_nhwc, halo)
        else:
            kernel = _nearest2x_kernel
            args = (x_nhwc,)

        out = pl.pallas_call(
            kernel,
            out_shape=out_shape,
            grid_spec=pltpu.PrefetchScalarGridSpec(
                num_scalar_prefetch=0,
                grid=(n, nt),
                in_specs=in_specs,
                out_specs=out_spec),
            compiler_params=compiler_params,
        )(*args)

        # (N, H, 2, W, 2C) -> (N, 2H, 2W, C): pure metadata reshape (row-major
        # offsets are identical), channels never tiled so no epilogue transpose.
        y = out.reshape(n, 2 * h, 2 * w, c)
        if self.data_format == 'NCHW':
            y = jnp.transpose(y, (0, 3, 1, 2))
        return y


# ----------------------------------------------------------------------------
# Pure-numpy references
# ----------------------------------------------------------------------------

def _reference_forward(x_nchw, mode):
    """Numpy reference matching the PyTorch module (nearest-2x [+ pad + blur])."""
    x = np.asarray(x_nchw, np.float32)
    u = np.repeat(np.repeat(x, 2, axis=2), 2, axis=3)   # nearest 2x
    if mode == 'nearest':
        return u
    pad_mode = 'constant' if mode == 'learned-3x3-zeropad' else 'edge'
    p = np.pad(u, ((0, 0), (0, 0), (1, 1), (1, 1)), mode=pad_mode)
    w = np.array([[0.0625, 0.125, 0.0625],
                  [0.125, 0.25, 0.125],
                  [0.0625, 0.125, 0.0625]], np.float32)
    out = np.zeros_like(u)
    H2, W2 = u.shape[2], u.shape[3]
    for di in range(3):
        for dj in range(3):
            out += w[di, dj] * p[:, :, di:di + H2, dj:dj + W2]
    return out


def _bilinear2x_reference(x_nchw):
    """Numpy reference for F.interpolate(scale=2, 'bilinear', align_corners=False)."""
    x = np.asarray(x_nchw, np.float32)
    N, C, H, W = x.shape

    def taps(nn):
        dst = np.arange(2 * nn)
        src = np.maximum((dst + 0.5) / 2.0 - 0.5, 0.0)
        i0 = np.floor(src).astype(np.int64)
        i1 = np.minimum(i0 + 1, nn - 1)
        f = (src - i0).astype(np.float32)
        return i0, i1, f

    r0, r1, fr = taps(H)
    c0, c1, fc = taps(W)
    xr = (x[:, :, r0, :] * (1 - fr)[None, None, :, None]
          + x[:, :, r1, :] * fr[None, None, :, None])
    y = (xr[:, :, :, c0] * (1 - fc)[None, None, None, :]
         + xr[:, :, :, c1] * fc[None, None, None, :])
    return y


# ----------------------------------------------------------------------------
# Self-test
# ----------------------------------------------------------------------------

if __name__ == "__main__":
    failures = []

    def check(name, got, want, atol=1e-5, rtol=1e-5):
        got = np.asarray(jnp.asarray(got).astype(jnp.float32))
        want = np.asarray(jnp.asarray(want).astype(jnp.float32))
        if got.shape != want.shape:
            failures.append(f"{name}: shape {got.shape} vs {want.shape}")
            return
        if not np.allclose(got, want, atol=atol, rtol=rtol):
            failures.append(f"{name}: max abs err {np.abs(got - want).max()}")

    # --- small NCHW f32, all modes (auto H-tile) ------------------------------
    N, C, H, W = 2, 4, 16, 16
    x = jax.random.normal(jax.random.PRNGKey(0), (N, C, H, W), jnp.float32)
    for mode in ('learned-3x3', 'learned-3x3-zeropad', 'nearest', 'bilinear'):
        mod = UpsamplePallas(mode, channels=C)
        y = jax.block_until_ready(mod(x))
        ref_mode = 'learned-3x3' if mode == 'bilinear' else mode
        check(f"f32/{mode}", y, _reference_forward(x, ref_mode))

    # bilinear additionally checked against an exact bilinear reference
    yb = jax.block_until_ready(UpsamplePallas('bilinear', channels=C)(x))
    check("f32/bilinear-exact", yb, _bilinear2x_reference(np.asarray(x)))

    # --- forced H-tiling (halo path), replicate and zero padding ---------------
    for mode in ('learned-3x3', 'learned-3x3-zeropad'):
        mod_ht = UpsamplePallas(mode, channels=C, h_tile=4)
        check(f"f32/h-tiled/{mode}", jax.block_until_ready(mod_ht(x)),
              _reference_forward(x, mode))
    # single-row tiles (boundary-only store path)
    mod_h1 = UpsamplePallas('learned-3x3', channels=C, h_tile=1)
    check("f32/h-tile-1", jax.block_until_ready(mod_h1(x)),
          _reference_forward(x, 'learned-3x3'))
    mod_nr = UpsamplePallas('nearest', channels=C, h_tile=8)
    check("f32/nearest-h-tiled", jax.block_until_ready(mod_nr(x)),
          _reference_forward(x, 'nearest'))

    # --- NHWC interface (no wrapper transposes) -------------------------------
    mod_nhwc = UpsamplePallas('learned-3x3', channels=C, data_format='NHWC')
    y_nhwc = jax.block_until_ready(mod_nhwc(jnp.transpose(x, (0, 2, 3, 1))))
    check("f32/NHWC", jnp.transpose(y_nhwc, (0, 3, 1, 2)),
          _reference_forward(x, 'learned-3x3'))

    # --- N=1, wide channels: auto tile picker forces >=2 grid steps ------------
    x2 = jax.random.normal(jax.random.PRNGKey(1), (1, 256, 8, 8), jnp.float32)
    mod_w = UpsamplePallas('learned-3x3', channels=256)
    check("f32/wide-channels", jax.block_until_ready(mod_w(x2)),
          _reference_forward(x2, 'learned-3x3'))

    # --- bf16 I/O (dtype preserved; bf16 compute on v6e/v7x, f32 elsewhere) ----
    x3 = jax.random.normal(jax.random.PRNGKey(2), (1, 128, 8, 8), jnp.float32)
    x3b = x3.astype(jnp.bfloat16)
    mod_bf = UpsamplePallas('bilinear', channels=128)
    y3 = jax.block_until_ready(mod_bf(x3b))
    if y3.dtype != jnp.bfloat16:
        failures.append(f"bf16/dtype: got {y3.dtype}")
    check("bf16/bilinear", y3,
          _reference_forward(np.asarray(x3b.astype(jnp.float32)), 'learned-3x3'),
          atol=2e-2, rtol=2e-2)

    if failures:
        for f in failures:
            print("MISMATCH", f)
    else:
        print("KERNEL_OK")
</pallas_src>

<mosaic_0001>
module attributes {stable_mosaic.version = 11 : i64} {
  func.func @_upsample_blur_kernel(%arg0: i32, %arg1: i32, %arg2: memref<1x16x16x4xf32, #tpu.memory_space<vmem>>, %arg3: memref<1x1x2x16x4xf32, #tpu.memory_space<vmem>>, %arg4: memref<1x16x2x16x8xf32, #tpu.memory_space<vmem>>) attributes {dimension_semantics = [#tpu.dimension_semantics<parallel>, #tpu.dimension_semantics<parallel>], iteration_bounds = array<i64: 2, 1>, scalar_prefetch = 0 : i64, scratch_operands = 0 : i64, tpu.core_type = #tpu.core_type<tc>, window_params = [{transform_indices = @transform_0, window_bounds = array<i64: 1, 16, 16, 4>}, {transform_indices = @transform_1, window_bounds = array<i64: 1, 1, 2, 16, 4>}, {transform_indices = @transform_2, window_bounds = array<i64: 1, 16, 2, 16, 8>}]} {
    %c0 = arith.constant 0 : index
    %c0_0 = arith.constant 0 : index
    %c0_1 = arith.constant 0 : index
    %c0_2 = arith.constant 0 : index
    %0 = vector.load %arg2[%c0, %c0_0, %c0_1, %c0_2] : memref<1x16x16x4xf32, #tpu.memory_space<vmem>>, vector<1x16x16x4xf32>
    %1 = vector.shape_cast %0 : vector<1x16x16x4xf32> to vector<16x16x4xf32>
    %c0_3 = arith.constant 0 : index
    %c0_4 = arith.constant 0 : index
    %c0_5 = arith.constant 0 : index
    %c0_6 = arith.constant 0 : index
    %c0_7 = arith.constant 0 : index
    %2 = vector.load %arg3[%c0_3, %c0_4, %c0_5, %c0_6, %c0_7] : memref<1x1x2x16x4xf32, #tpu.memory_space<vmem>>, vector<1x1x2x16x4xf32>
    %3 = vector.shape_cast %2 : vector<1x1x2x16x4xf32> to vector<2x16x4xf32>
    %4 = vector.extract_strided_slice %1 {offsets = [0, 0, 0], sizes = [16, 1, 4], strides = [1, 1, 1]} : vector<16x16x4xf32> to vector<16x1x4xf32>
    %5 = vector.extract_strided_slice %1 {offsets = [0, 0, 0], sizes = [16, 15, 4], strides = [1, 1, 1]} : vector<16x16x4xf32> to vector<16x15x4xf32>
    %6 = tpu.concatenate %4, %5 in 1 : vector<16x1x4xf32>, vector<16x15x4xf32> -> vector<16x16x4xf32>
    %7 = vector.extract_strided_slice %1 {offsets = [0, 1, 0], sizes = [16, 15, 4], strides = [1, 1, 1]} : vector<16x16x4xf32> to vector<16x15x4xf32>
    %8 = vector.extract_strided_slice %1 {offsets = [0, 15, 0], sizes = [16, 1, 4], strides = [1, 1, 1]} : vector<16x16x4xf32> to vector<16x1x4xf32>
    %9 = tpu.concatenate %7, %8 in 1 : vector<16x15x4xf32>, vector<16x1x4xf32> -> vector<16x16x4xf32>
    %cst = arith.constant 2.500000e-01 : f32
    %10 = vector.broadcast %cst : f32 to vector<16x16x4xf32>
    %11 = arith.mulf %10, %6 : vector<16x16x4xf32>
    %cst_8 = arith.constant 7.500000e-01 : f32
    %12 = vector.broadcast %cst_8 : f32 to vector<16x16x4xf32>
    %13 = arith.mulf %12, %1 : vector<16x16x4xf32>
    %14 = arith.addf %11, %13 : vector<16x16x4xf32>
    %cst_9 = arith.constant 7.500000e-01 : f32
    %15 = vector.broadcast %cst_9 : f32 to vector<16x16x4xf32>
    %16 = arith.mulf %15, %1 : vector<16x16x4xf32>
    %cst_10 = arith.constant 2.500000e-01 : f32
    %17 = vector.broadcast %cst_10 : f32 to vector<16x16x4xf32>
    %18 = arith.mulf %17, %9 : vector<16x16x4xf32>
    %19 = arith.addf %16, %18 : vector<16x16x4xf32>
    %20 = vector.extract_strided_slice %3 {offsets = [0, 0, 0], sizes = [2, 1, 4], strides = [1, 1, 1]} : vector<2x16x4xf32> to vector<2x1x4xf32>
    %21 = vector.extract_strided_slice %3 {offsets = [0, 0, 0], sizes = [2, 15, 4], strides = [1, 1, 1]} : vector<2x16x4xf32> to vector<2x15x4xf32>
    %22 = tpu.concatenate %20, %21 in 1 : vector<2x1x4xf32>, vector<2x15x4xf32> -> vector<2x16x4xf32>
    %23 = vector.extract_strided_slice %3 {offsets = [0, 1, 0], sizes = [2, 15, 4], strides = [1, 1, 1]} : vector<2x16x4xf32> to vector<2x15x4xf32>
    %24 = vector.extract_strided_slice %3 {offsets = [0, 15, 0], sizes = [2, 1, 4], strides = [1, 1, 1]} : vector<2x16x4xf32> to vector<2x1x4xf32>
    %25 = tpu.concatenate %23, %24 in 1 : vector<2x15x4xf32>, vector<2x1x4xf32> -> vector<2x16x4xf32>
    %cst_11 = arith.constant 2.500000e-01 : f32
    %26 = vector.broadcast %cst_11 : f32 to vector<2x16x4xf32>
    %27 = arith.mulf %26, %22 : vector<2x16x4xf32>
    %cst_12 = arith.constant 7.500000e-01 : f32
    %28 = vector.broadcast %cst_12 : f32 to vector<2x16x4xf32>
    %29 = arith.mulf %28, %3 : vector<2x16x4xf32>
    %30 = arith.addf %27, %29 : vector<2x16x4xf32>
    %cst_13 = arith.constant 7.500000e-01 : f32
    %31 = vector.broadcast %cst_13 : f32 to vector<2x16x4xf32>
    %32 = arith.mulf %31, %3 : vector<2x16x4xf32>
    %cst_14 = arith.constant 2.500000e-01 : f32
    %33 = vector.broadcast %cst_14 : f32 to vector<2x16x4xf32>
    %34 = arith.mulf %33, %25 : vector<2x16x4xf32>
    %35 = arith.addf %32, %34 : vector<2x16x4xf32>
    %36 = vector.extract_strided_slice %30 {offsets = [0, 0, 0], sizes = [1, 16, 4], strides = [1, 1, 1]} : vector<2x16x4xf32> to vector<1x16x4xf32>
    %37 = vector.shape_cast %36 : vector<1x16x4xf32> to vector<16x4xf32>
    %cst_15 = arith.constant 2.500000e-01 : f32
    %38 = vector.broadcast %cst_15 : f32 to vector<16x4xf32>
    %39 = arith.mulf %38, %37 : vector<16x4xf32>
    %40 = vector.extract_strided_slice %14 {offsets = [0, 0, 0], sizes = [1, 16, 4], strides = [1, 1, 1]} : vector<16x16x4xf32> to vector<1x16x4xf32>
    %41 = vector.shape_cast %40 : vector<1x16x4xf32> to vector<16x4xf32>
    %cst_16 = arith.constant 7.500000e-01 : f32
    %42 = vector.broadcast %cst_16 : f32 to vector<16x4xf32>
    %43 = arith.mulf %42, %41 : vector<16x4xf32>
    %44 = arith.addf %39, %43 : vector<16x4xf32>
    %c0_17 = arith.constant 0 : index
    %c0_18 = arith.constant 0 : index
    %c0_19 = arith.constant 0 : index
    %c0_20 = arith.constant 0 : index
    %c0_21 = arith.constant 0 : index
    %45 = vector.load %arg4[%c0_17, %c0_18, %c0_19, %c0_20, %c0_21] : memref<1x16x2x16x8xf32, #tpu.memory_space<vmem>>, vector<1x1x1x16x4xf32>
    %46 = vector.shape_cast %45 : vector<1x1x1x16x4xf32> to vector<16x4xf32>
    %47 = vector.shape_cast %44 : vector<16x4xf32> to vector<1x1x1x16x4xf32>
    tpu.vector_store %arg4[%c0_17, %c0_18, %c0_19, %c0_20, %c0_21], %47 {strides = array<i32>} : memref<1x16x2x16x8xf32, #tpu.memory_space<vmem>>, vector<1x1x1x16x4xf32>,
    %48 = vector.extract_strided_slice %35 {offsets = [0, 0, 0], sizes = [1, 16, 4], strides = [1, 1, 1]} : vector<2x16x4xf32> to vector<1x16x4xf32>
    %49 = vector.shape_cast %48 : vector<1x16x4xf32> to vector<16x4xf32>
    %cst_22 = arith.constant 2.500000e-01 : f32
    %50 = vector.broadcast %cst_22 : f32 to vector<16x4xf32>
    %51 = arith.mulf %50, %49 : vector<16x4xf32>
    %52 = vector.extract_strided_slice %19 {offsets = [0, 0, 0], sizes = [1, 16, 4], strides = [1, 1, 1]} : vector<16x16x4xf32> to vector<1x16x4xf32>
    %53 = vector.shape_cast %52 : vector<1x16x4xf32> to vector<16x4xf32>
    %cst_23 = arith.constant 7.500000e-01 : f32
    %54 = vector.broadcast %cst_23 : f32 to vector<16x4xf32>
    %55 = arith.mulf %54, %53 : vector<16x4xf32>
    %56 = arith.addf %51, %55 : vector<16x4xf32>
    %c0_24 = arith.constant 0 : index
    %c0_25 = arith.constant 0 : index
    %c0_26 = arith.constant 0 : index
    %c0_27 = arith.constant 0 : index
    %c4 = arith.constant 4 : index
    %57 = vector.load %arg4[%c0_24, %c0_25, %c0_26, %c0_27, %c4] : memref<1x16x2x16x8xf32, #tpu.memory_space<vmem>>, vector<1x1x1x16x4xf32>
    %58 = vector.shape_cast %57 : vector<1x1x1x16x4xf32> to vector<16x4xf32>
    %59 = vector.shape_cast %56 : vector<16x4xf32> to vector<1x1x1x16x4xf32>
    tpu.vector_store %arg4[%c0_24, %c0_25, %c0_26, %c0_27, %c4], %59 {strides = array<i32>} : memref<1x16x2x16x8xf32, #tpu.memory_space<vmem>>, vector<1x1x1x16x4xf32>,
    %60 = vector.extract_strided_slice %14 {offsets = [15, 0, 0], sizes = [1, 16, 4], strides = [1, 1, 1]} : vector<16x16x4xf32> to vector<1x16x4xf32>
    %61 = vector.shape_cast %60 : vector<1x16x4xf32> to vector<16x4xf32>
    %cst_28 = arith.constant 7.500000e-01 : f32
    %62 = vector.broadcast %cst_28 : f32 to vector<16x4xf32>
    %63 = arith.mulf %62, %61 : vector<16x4xf32>
    %64 = vector.extract_strided_slice %30 {offsets = [1, 0, 0], sizes = [1, 16, 4], strides = [1, 1, 1]} : vector<2x16x4xf32> to vector<1x16x4xf32>
    %65 = vector.shape_cast %64 : vector<1x16x4xf32> to vector<16x4xf32>
    %cst_29 = arith.constant 2.500000e-01 : f32
    %66 = vector.broadcast %cst_29 : f32 to vector<16x4xf32>
    %67 = arith.mulf %66, %65 : vector<16x4xf32>
    %68 = arith.addf %63, %67 : vector<16x4xf32>
    %c0_30 = arith.constant 0 : index
    %c15 = arith.constant 15 : index
    %c1 = arith.constant 1 : index
    %c0_31 = arith.constant 0 : index
    %c0_32 = arith.constant 0 : index
    %69 = vector.load %arg4[%c0_30, %c15, %c1, %c0_31, %c0_32] : memref<1x16x2x16x8xf32, #tpu.memory_space<vmem>>, vector<1x1x1x16x4xf32>
    %70 = vector.shape_cast %69 : vector<1x1x1x16x4xf32> to vector<16x4xf32>
    %71 = vector.shape_cast %68 : vector<16x4xf32> to vector<1x1x1x16x4xf32>
    tpu.vector_store %arg4[%c0_30, %c15, %c1, %c0_31, %c0_32], %71 {strides = array<i32>} : memref<1x16x2x16x8xf32, #tpu.memory_space<vmem>>, vector<1x1x1x16x4xf32>,
    %72 = vector.extract_strided_slice %19 {offsets = [15, 0, 0], sizes = [1, 16, 4], strides = [1, 1, 1]} : vector<16x16x4xf32> to vector<1x16x4xf32>
    %73 = vector.shape_cast %72 : vector<1x16x4xf32> to vector<16x4xf32>
    %cst_33 = arith.constant 7.500000e-01 : f32
    %74 = vector.broadcast %cst_33 : f32 to vector<16x4xf32>
    %75 = arith.mulf %74, %73 : vector<16x4xf32>
    %76 = vector.extract_strided_slice %35 {offsets = [1, 0, 0], sizes = [1, 16, 4], strides = [1, 1, 1]} : vector<2x16x4xf32> to vector<1x16x4xf32>
    %77 = vector.shape_cast %76 : vector<1x16x4xf32> to vector<16x4xf32>
    %cst_34 = arith.constant 2.500000e-01 : f32
    %78 = vector.broadcast %cst_34 : f32 to vector<16x4xf32>
    %79 = arith.mulf %78, %77 : vector<16x4xf32>
    %80 = arith.addf %75, %79 : vector<16x4xf32>
    %c0_35 = arith.constant 0 : index
    %c15_36 = arith.constant 15 : index
    %c1_37 = arith.constant 1 : index
    %c0_38 = arith.constant 0 : index
    %c4_39 = arith.constant 4 : index
    %81 = vector.load %arg4[%c0_35, %c15_36, %c1_37, %c0_38, %c4_39] : memref<1x16x2x16x8xf32, #tpu.memory_space<vmem>>, vector<1x1x1x16x4xf32>
    %82 = vector.shape_cast %81 : vector<1x1x1x16x4xf32> to vector<16x4xf32>
    %83 = vector.shape_cast %80 : vector<16x4xf32> to vector<1x1x1x16x4xf32>
    tpu.vector_store %arg4[%c0_35, %c15_36, %c1_37, %c0_38, %c4_39], %83 {strides = array<i32>} : memref<1x16x2x16x8xf32, #tpu.memory_space<vmem>>, vector<1x1x1x16x4xf32>,
    %84 = vector.extract_strided_slice %14 {offsets = [0, 0, 0], sizes = [15, 16, 4], strides = [1, 1, 1]} : vector<16x16x4xf32> to vector<15x16x4xf32>
    %cst_40 = arith.constant 2.500000e-01 : f32
    %85 = vector.broadcast %cst_40 : f32 to vector<15x16x4xf32>
    %86 = arith.mulf %85, %84 : vector<15x16x4xf32>
    %87 = vector.extract_strided_slice %14 {offsets = [1, 0, 0], sizes = [15, 16, 4], strides = [1, 1, 1]} : vector<16x16x4xf32> to vector<15x16x4xf32>
    %cst_41 = arith.constant 7.500000e-01 : f32
    %88 = vector.broadcast %cst_41 : f32 to vector<15x16x4xf32>
    %89 = arith.mulf %88, %87 : vector<15x16x4xf32>
    %90 = arith.addf %86, %89 : vector<15x16x4xf32>
    %c0_42 = arith.constant 0 : index
    %c1_43 = arith.constant 1 : index
    %c0_44 = arith.constant 0 : index
    %c0_45 = arith.constant 0 : index
    %c0_46 = arith.constant 0 : index
    %91 = vector.load %arg4[%c0_42, %c1_43, %c0_44, %c0_45, %c0_46] : memref<1x16x2x16x8xf32, #tpu.memory_space<vmem>>, vector<1x15x1x16x4xf32>
    %92 = vector.shape_cast %91 : vector<1x15x1x16x4xf32> to vector<15x16x4xf32>
    %93 = vector.shape_cast %90 : vector<15x16x4xf32> to vector<1x15x1x16x4xf32>
    tpu.vector_store %arg4[%c0_42, %c1_43, %c0_44, %c0_45, %c0_46], %93 {strides = array<i32>} : memref<1x16x2x16x8xf32, #tpu.memory_space<vmem>>, vector<1x15x1x16x4xf32>,
    %94 = vector.extract_strided_slice %19 {offsets = [0, 0, 0], sizes = [15, 16, 4], strides = [1, 1, 1]} : vector<16x16x4xf32> to vector<15x16x4xf32>
    %cst_47 = arith.constant 2.500000e-01 : f32
    %95 = vector.broadcast %cst_47 : f32 to vector<15x16x4xf32>
    %96 = arith.mulf %95, %94 : vector<15x16x4xf32>
    %97 = vector.extract_strided_slice %19 {offsets = [1, 0, 0], sizes = [15, 16, 4], strides = [1, 1, 1]} : vector<16x16x4xf32> to vector<15x16x4xf32>
    %cst_48 = arith.constant 7.500000e-01 : f32
    %98 = vector.broadcast %cst_48 : f32 to vector<15x16x4xf32>
    %99 = arith.mulf %98, %97 : vector<15x16x4xf32>
    %100 = arith.addf %96, %99 : vector<15x16x4xf32>
    %c0_49 = arith.constant 0 : index
    %c1_50 = arith.constant 1 : index
    %c0_51 = arith.constant 0 : index
    %c0_52 = arith.constant 0 : index
    %c4_53 = arith.constant 4 : index
    %101 = vector.load %arg4[%c0_49, %c1_50, %c0_51, %c0_52, %c4_53] : memref<1x16x2x16x8xf32, #tpu.memory_space<vmem>>, vector<1x15x1x16x4xf32>
    %102 = vector.shape_cast %101 : vector<1x15x1x16x4xf32> to vector<15x16x4xf32>
    %103 = vector.shape_cast %100 : vector<15x16x4xf32> to vector<1x15x1x16x4xf32>
    tpu.vector_store %arg4[%c0_49, %c1_50, %c0_51, %c0_52, %c4_53], %103 {strides = array<i32>} : memref<1x16x2x16x8xf32, #tpu.memory_space<vmem>>, vector<1x15x1x16x4xf32>,
    %104 = vector.extract_strided_slice %14 {offsets = [0, 0, 0], sizes = [15, 16, 4], strides = [1, 1, 1]} : vector<16x16x4xf32> to vector<15x16x4xf32>
    %cst_54 = arith.constant 7.500000e-01 : f32
    %105 = vector.broadcast %cst_54 : f32 to vector<15x16x4xf32>
    %106 = arith.mulf %105, %104 : vector<15x16x4xf32>
    %107 = vector.extract_strided_slice %14 {offsets = [1, 0, 0], sizes = [15, 16, 4], strides = [1, 1, 1]} : vector<16x16x4xf32> to vector<15x16x4xf32>
    %cst_55 = arith.constant 2.500000e-01 : f32
    %108 = vector.broadcast %cst_55 : f32 to vector<15x16x4xf32>
    %109 = arith.mulf %108, %107 : vector<15x16x4xf32>
    %110 = arith.addf %106, %109 : vector<15x16x4xf32>
    %c0_56 = arith.constant 0 : index
    %c0_57 = arith.constant 0 : index
    %c1_58 = arith.constant 1 : index
    %c0_59 = arith.constant 0 : index
    %c0_60 = arith.constant 0 : index
    %111 = vector.load %arg4[%c0_56, %c0_57, %c1_58, %c0_59, %c0_60] : memref<1x16x2x16x8xf32, #tpu.memory_space<vmem>>, vector<1x15x1x16x4xf32>
    %112 = vector.shape_cast %111 : vector<1x15x1x16x4xf32> to vector<15x16x4xf32>
    %113 = vector.shape_cast %110 : vector<15x16x4xf32> to vector<1x15x1x16x4xf32>
    tpu.vector_store %arg4[%c0_56, %c0_57, %c1_58, %c0_59, %c0_60], %113 {strides = array<i32>} : memref<1x16x2x16x8xf32, #tpu.memory_space<vmem>>, vector<1x15x1x16x4xf32>,
    %114 = vector.extract_strided_slice %19 {offsets = [0, 0, 0], sizes = [15, 16, 4], strides = [1, 1, 1]} : vector<16x16x4xf32> to vector<15x16x4xf32>
    %cst_61 = arith.constant 7.500000e-01 : f32
    %115 = vector.broadcast %cst_61 : f32 to vector<15x16x4xf32>
    %116 = arith.mulf %115, %114 : vector<15x16x4xf32>
    %117 = vector.extract_strided_slice %19 {offsets = [1, 0, 0], sizes = [15, 16, 4], strides = [1, 1, 1]} : vector<16x16x4xf32> to vector<15x16x4xf32>
    %cst_62 = arith.constant 2.500000e-01 : f32
    %118 = vector.broadcast %cst_62 : f32 to vector<15x16x4xf32>
    %119 = arith.mulf %118, %117 : vector<15x16x4xf32>
    %120 = arith.addf %116, %119 : vector<15x16x4xf32>
    %c0_63 = arith.constant 0 : index
    %c0_64 = arith.constant 0 : index
    %c1_65 = arith.constant 1 : index
    %c0_66 = arith.constant 0 : index
    %c4_67 = arith.constant 4 : index
    %121 = vector.load %arg4[%c0_63, %c0_64, %c1_65, %c0_66, %c4_67] : memref<1x16x2x16x8xf32, #tpu.memory_space<vmem>>, vector<1x15x1x16x4xf32>
    %122 = vector.shape_cast %121 : vector<1x15x1x16x4xf32> to vector<15x16x4xf32>
    %123 = vector.shape_cast %120 : vector<15x16x4xf32> to vector<1x15x1x16x4xf32>
    tpu.vector_store %arg4[%c0_63, %c0_64, %c1_65, %c0_66, %c4_67], %123 {strides = array<i32>} : memref<1x16x2x16x8xf32, #tpu.memory_space<vmem>>, vector<1x15x1x16x4xf32>,
    return
  }
  func.func @transform_0(%arg0: i32, %arg1: i32) -> (i32, i32, i32, i32) {
    %c0_i32 = arith.constant 0 : i32
    %c0_i32_0 = arith.constant 0 : i32
    %c0_i32_1 = arith.constant 0 : i32
    return %arg0, %arg1, %c0_i32, %c0_i32_0 : i32, i32, i32, i32
  }
  func.func @transform_1(%arg0: i32, %arg1: i32) -> (i32, i32, i32, i32, i32) {
    %c0_i32 = arith.constant 0 : i32
    %c0_i32_0 = arith.constant 0 : i32
    %c0_i32_1 = arith.constant 0 : i32
    %c0_i32_2 = arith.constant 0 : i32
    return %arg0, %arg1, %c0_i32, %c0_i32_0, %c0_i32_1 : i32, i32, i32, i32, i32
  }
  func.func @transform_2(%arg0: i32, %arg1: i32) -> (i32, i32, i32, i32, i32) {
    %c0_i32 = arith.constant 0 : i32
    %c0_i32_0 = arith.constant 0 : i32
    %c0_i32_1 = arith.constant 0 : i32
    %c0_i32_2 = arith.constant 0 : i32
    return %arg0, %arg1, %c0_i32, %c0_i32_0, %c0_i32_1 : i32, i32, i32, i32, i32
  }
}

</mosaic_0001>

<llo_original>
// kernel: tpu_custom_call.1
$region0: #{tpu_custom_call.1}
  #allocation0 [shape = 'u32[]', space=smem, size = 0x4, offset = 0x4, fixed_abs, tag = 'smem constant byte address 0x4 - core index']
  #allocation1 [shape = 'u32[144,128]{1,0:T(1,128)}', space=vmem, size = 0x12000, scoped, tag = 'internal scratch']
  %s0 = inlined_call_operand.vmem [shape: f32[2,16,16,4], index: 0, kind: input, shape index: {}]
  %s1 = inlined_call_operand.vmem [shape: f32[2,1,2,16,4], index: 1, kind: input, shape index: {}]
  %s2 = inlined_call_operand.vmem [shape: f32[2,16,2,16,8], index: 2, kind: output, shape index: {}]
  %s3 = sld [smem:[#allocation0]]
  $region41: #{tpu_custom_call.1} parent=0
    _
  %s5 = ssub.s32 1, %s3
  %s6 = scalar_select 0, %s5, %s3
  loop: start=0, step=1, limit=4
  $region2: #{tpu_custom_call.1} parent=0 // loop_pre_header
    _
  $region3: #{tpu_custom_call.1} parent=0 // loop_header
    %s8 = sphi 0, %s12
    %p9 = scmp.ge.s32.totalorder %s8, 4
    %s15 = sphi 0, %s27
    %s16 = sphi 0, %s23
    %s17 = sphi 0, %s15
    %s18 = sphi 0, %s16
    %s19 = sphi 0, %s17
    %s20 = sphi 0, %s18
    %s32 = sphi 0, %s34
    %s35 = sphi 0, %s32
    %s36 = sphi 0, %s35
    %s52 = sphi 0, %s36
    %s60 = sphi 0, %s62
    %s63 = sphi 0, %s60
    %s64 = sphi 0, %s63
    %s80 = sphi 0, %s64
    %s88 = sphi 0, %s90
    %s91 = sphi 0, %s88
    %s92 = sphi 0, %s91
    %s108 = sphi 0, %s92
  $region4: #{tpu_custom_call.1} parent=0 // loop_header_branch
    %11 = sbr.rel (%p9) target = $region8
  $region5: #{tpu_custom_call.1} parent=0 // loop_body
    %s13 = ssub.s32 %s8, 1
    %s14 = ssub.s32 %s8, 2
    %s21 = sadd.s32 1, %s16
    %p22 = scmp.ge.s32.totalorder %s21, 1
    %s23 = scalar_select %p22, 0, %s21
    %s24 = sadd.s32 1, %s15
    %s25 = scalar_select %p22, %s24, %s15
    %p26 = scmp.ge.s32.totalorder %s25, 2
    %s27 = scalar_select %p26, 0, %s25
    %s28 = ssub.s32 %s15, %s27
    %s29 = ssub.s32 %s16, %s23
    %s30 = sor.u32 %s28, %s29
    %p31 = scmp.eq.s32.totalorder %s30, 0
    %s33 = sadd.s32 %s32, 1
    %s34 = scalar_select %p31, %s32, %s33
    %p37 = pneg %p31
    %p38 = scmp.eq.s32.totalorder %s8, 1
    %p39 = por %p37, %p38
    %p40 = scmp.ne.s32.totalorder %s32, %s35
    %p41 = scmp.eq.s32.totalorder %s8, 0
    %p42 = por %p40, %p41
    %p43 = scmp.ne.s32.totalorder %s32, %s35
    %p44 = scmp.eq.s32.totalorder %s13, 1
    %p45 = por %p43, %p44
    %p46 = scmp.ne.s32.totalorder %s35, %s36
    %p47 = scmp.eq.s32.totalorder %s13, 0
    %p48 = por %p46, %p47
    %p49 = scmp.ne.s32.totalorder %s35, %s36
    %p50 = scmp.eq.s32.totalorder %s14, 1
    %p51 = por %p49, %p50
    %p53 = scmp.ne.s32.totalorder %s36, %s52
    %p54 = scmp.eq.s32.totalorder %s14, 0
    %p55 = por %p53, %p54
    %s56 = ssub.s32 %s15, %s27
    %s57 = ssub.s32 %s16, %s23
    %s58 = sor.u32 %s56, %s57
    %p59 = scmp.eq.s32.totalorder %s58, 0
    %s61 = sadd.s32 %s60, 1
    %s62 = scalar_select %p59, %s60, %s61
    %p65 = pneg %p59
    %p66 = scmp.eq.s32.totalorder %s8, 1
    %p67 = por %p65, %p66
    %p68 = scmp.ne.s32.totalorder %s60, %s63
    %p69 = scmp.eq.s32.totalorder %s8, 0
    %p70 = por %p68, %p69
    %p71 = scmp.ne.s32.totalorder %s60, %s63
    %p72 = scmp.eq.s32.totalorder %s13, 1
    %p73 = por %p71, %p72
    %p74 = scmp.ne.s32.totalorder %s63, %s64
    %p75 = scmp.eq.s32.totalorder %s13, 0
    %p76 = por %p74, %p75
    %p77 = scmp.ne.s32.totalorder %s63, %s64
    %p78 = scmp.eq.s32.totalorder %s14, 1
    %p79 = por %p77, %p78
    %p81 = scmp.ne.s32.totalorder %s64, %s80
    %p82 = scmp.eq.s32.totalorder %s14, 0
    %p83 = por %p81, %p82
    %s84 = ssub.s32 %s15, %s27
    %s85 = ssub.s32 %s16, %s23
    %s86 = sor.u32 %s84, %s85
    %p87 = scmp.eq.s32.totalorder %s86, 0
    %s89 = sadd.s32 %s88, 1
    %s90 = scalar_select %p87, %s88, %s89
    %p93 = pneg %p87
    %p94 = scmp.eq.s32.totalorder %s8, 1
    %p95 = por %p93, %p94
    %p96 = scmp.ne.s32.totalorder %s88, %s91
    %p97 = scmp.eq.s32.totalorder %s8, 0
    %p98 = por %p96, %p97
    %p99 = scmp.ne.s32.totalorder %s88, %s91
    %p100 = scmp.eq.s32.totalorder %s13, 1
    %p101 = por %p99, %p100
    %p102 = scmp.ne.s32.totalorder %s91, %s92
    %p103 = scmp.eq.s32.totalorder %s13, 0
    %p104 = por %p102, %p103
    %p105 = scmp.ne.s32.totalorder %s91, %s92
    %p106 = scmp.eq.s32.totalorder %s14, 1
    %p107 = por %p105, %p106
    %p109 = scmp.ne.s32.totalorder %s92, %s108
    %p110 = scmp.eq.s32.totalorder %s14, 0
    %p111 = por %p109, %p110
    %p112 = scmp.le.s32.totalorder 1, %s8
    %p113 = scmp.lt.s32.totalorder %s8, 3
    %p114 = pnand %p112, %p113
    %p115 = pneg %p114
    // Predicated region
    $region9: #{tpu_custom_call.1} parent=5 // pred_check
      _
    $region10: #{tpu_custom_call.1} parent=5 // pred_check_branch
      %117 = sbr.rel (%p114) target = $region12
    $region11: #{tpu_custom_call.1} parent=5 // pred_region
      %s118 = ssub.s32 %s8, 1
    $region12: #{tpu_custom_call.1} parent=5 // pred_fallthru
      _
    %p119 = scmp.lt.s32.totalorder %s8, 2
    // Predicated region
    $region13: #{tpu_custom_call.1} parent=5 // pred_check
      %p120 = pneg %p119
    $region14: #{tpu_custom_call.1} parent=5 // pred_check_branch
      %122 = sbr.rel (%p120) target = $region16
    $region15: #{tpu_custom_call.1} parent=5 // pred_region
      // Predicated region
      $region17: #{tpu_custom_call.1} parent=15 // pred_check
        %p123 = pneg %p42
      $region18: #{tpu_custom_call.1} parent=15 // pred_check_branch
        %125 = sbr.rel (%p123) target = $region20
      $region19: #{tpu_custom_call.1} parent=15 // pred_region
        %s126 = smul.u32 16, %s16
        %p127 = scmp.lt.s32.totalorder %s15, 1
        %s128 = scalar_select %p127, %s15, 1
        %p129 = scmp.lt.s32.totalorder %s126, 15
        %s130 = scalar_select %p129, %s126, 15
        %s131 = smul.addr %s130, 2
        %s132 = smul.addr %s128, 32
        %s133 = sadd.s32 %s131, %s132
        %s134 = smul.addr %s133, 8
        %s135 = scalar_lea.vmem %s0, %s134
        %s136 = smul.u32 16, %s16
      $region20: #{tpu_custom_call.1} parent=15 // pred_fallthru
        _
      // Predicated region
      $region21: #{tpu_custom_call.1} parent=15 // pred_check
        %p137 = pneg %p70
      $region22: #{tpu_custom_call.1} parent=15 // pred_check_branch
        %139 = sbr.rel (%p137) target = $region24
      $region23: #{tpu_custom_call.1} parent=15 // pred_region
        %p140 = scmp.lt.s32.totalorder %s15, 1
        %s141 = scalar_select %p140, %s15, 1
        %p142 = scmp.lt.s32.totalorder %s16, 0
        %s143 = scalar_select %p142, %s16, 0
        %s144 = smul.addr %s143, 4
        %s145 = smul.addr %s141, 4
        %s146 = sadd.s32 %s144, %s145
        %s147 = smul.addr %s146, 8
        %s148 = scalar_lea.vmem %s1, %s147
      $region24: #{tpu_custom_call.1} parent=15 // pred_fallthru
        _
    $region16: #{tpu_custom_call.1} parent=5 // pred_fallthru
      _
    %p149 = scmp.le.s32.totalorder 1, %s8
    %p150 = scmp.lt.s32.totalorder %s8, 3
    %p151 = pnand %p149, %p150
    %p152 = pneg %p151
    // Predicated region
    $region25: #{tpu_custom_call.1} parent=5 // pred_check
      _
    $region26: #{tpu_custom_call.1} parent=5 // pred_check_branch
      %154 = sbr.rel (%p151) target = $region28
    $region27: #{tpu_custom_call.1} parent=5 // pred_region
      %s155 = ssub.s32 %s8, 1
      %s156 = smul.u32 16, %s18
      %p157 = scmp.lt.s32.totalorder %s17, 1
      %s158 = scalar_select %p157, %s17, 1
      %p159 = scmp.lt.s32.totalorder %s156, 15
      %s160 = scalar_select %p159, %s156, 15
      %s161 = smul.addr %s160, 2
      %s162 = smul.addr %s158, 32
      %s163 = sadd.s32 %s161, %s162
      %s164 = smul.addr %s163, 8
      %s165 = scalar_lea.vmem %s0, %s164
      %p166 = pneg %p48
      %p167 = pneg %p45
      %p168 = scmp.lt.s32.totalorder %s17, 1
      %s169 = scalar_select %p168, %s17, 1
      %p170 = scmp.lt.s32.totalorder %s18, 0
      %s171 = scalar_select %p170, %s18, 0
      %s172 = smul.addr %s171, 4
      %s173 = smul.addr %s169, 4
      %s174 = sadd.s32 %s172, %s173
      %s175 = smul.addr %s174, 8
      %s176 = scalar_lea.vmem %s1, %s175
      %p177 = pneg %p76
      %p178 = pneg %p73
      %p179 = pneg %p104
      %p180 = pneg %p101
      %s181 = smul.u32 16, %s18
      %p182 = scmp.lt.s32.totalorder %s17, 1
      %s183 = scalar_select %p182, %s17, 1
      %p184 = scmp.lt.s32.totalorder %s181, 15
      %s185 = scalar_select %p184, %s181, 15
      %s186 = smul.addr %s185, 4
      %s187 = smul.addr %s183, 64
      %s188 = sadd.s32 %s186, %s187
      %s189 = smul.addr %s188, 8
      %s190 = scalar_lea.vmem %s2, %s189
      %s191 = smul.u32 16, %s18
      %p192 = scmp.lt.s32.totalorder %s17, 1
      %s193 = scalar_select %p192, %s17, 1
      %p194 = scmp.lt.s32.totalorder %s191, 15
      %s195 = scalar_select %p194, %s191, 15
      %s196 = smul.addr %s195, 2
      %s197 = smul.addr %s193, 32
      %s198 = sadd.s32 %s196, %s197
      %s199 = smul.addr %s198, 8
      %s200 = scalar_lea.vmem %s0, %s199
      %s201 = smul.u32 16, %s18
      %p202 = scmp.lt.s32.totalorder %s17, 1
      %s203 = scalar_select %p202, %s17, 1
      %p204 = scmp.lt.s32.totalorder %s18, 0
      %s205 = scalar_select %p204, %s18, 0
      %s206 = smul.addr %s205, 4
      %s207 = smul.addr %s203, 4
      %s208 = sadd.s32 %s206, %s207
      %s209 = smul.addr %s208, 8
      %s210 = scalar_lea.vmem %s1, %s209
      %s211 = smul.u32 16, %s18
      %p212 = scmp.lt.s32.totalorder %s17, 1
      %s213 = scalar_select %p212, %s17, 1
      %p214 = scmp.lt.s32.totalorder %s211, 15
      %s215 = scalar_select %p214, %s211, 15
      %s216 = smul.addr %s215, 4
      %s217 = smul.addr %s213, 64
      %s218 = sadd.s32 %s216, %s217
      %s219 = smul.addr %s218, 8
      %s220 = scalar_lea.vmem %s2, %s219
      %s221 = smul.u32 16, %s18
      %v222 = vld [vmem:[%s200] sm:$0xff]
      %v223 = vld [vmem:[%s200 + $0x8] sm:$0xff]
      %v224 = vld [vmem:[%s200 + $0x10] sm:$0xff]
      %v225 = vld [vmem:[%s200 + $0x18] sm:$0xff]
      %v226 = vld [vmem:[%s200 + $0x20] sm:$0xff]
      %v227 = vld [vmem:[%s200 + $0x28] sm:$0xff]
      %v228 = vld [vmem:[%s200 + $0x30] sm:$0xff]
      %v229 = vld [vmem:[%s200 + $0x38] sm:$0xff]
      %v230 = vld [vmem:[%s200 + $0x40] sm:$0xff]
      %v231 = vld [vmem:[%s200 + $0x48] sm:$0xff]
      %v232 = vld [vmem:[%s200 + $0x50] sm:$0xff]
      %v233 = vld [vmem:[%s200 + $0x58] sm:$0xff]
      %v234 = vld [vmem:[%s200 + $0x60] sm:$0xff]
      %v235 = vld [vmem:[%s200 + $0x68] sm:$0xff]
      %v236 = vld [vmem:[%s200 + $0x70] sm:$0xff]
      %v237 = vld [vmem:[%s200 + $0x78] sm:$0xff]
      %v238 = vld [vmem:[%s200 + $0x80] sm:$0xff]
      %v239 = vld [vmem:[%s200 + $0x88] sm:$0xff]
      %v240 = vld [vmem:[%s200 + $0x90] sm:$0xff]
      %v241 = vld [vmem:[%s200 + $0x98] sm:$0xff]
      %v242 = vld [vmem:[%s200 + $0xa0] sm:$0xff]
      %v243 = vld [vmem:[%s200 + $0xa8] sm:$0xff]
      %v244 = vld [vmem:[%s200 + $0xb0] sm:$0xff]
      %v245 = vld [vmem:[%s200 + $0xb8] sm:$0xff]
      %v246 = vld [vmem:[%s200 + $0xc0] sm:$0xff]
      %v247 = vld [vmem:[%s200 + $0xc8] sm:$0xff]
      %v248 = vld [vmem:[%s200 + $0xd0] sm:$0xff]
      %v249 = vld [vmem:[%s200 + $0xd8] sm:$0xff]
      %v250 = vld [vmem:[%s200 + $0xe0] sm:$0xff]
      %v251 = vld [vmem:[%s200 + $0xe8] sm:$0xff]
      %v252 = vld [vmem:[%s200 + $0xf0] sm:$0xff]
      %v253 = vld [vmem:[%s200 + $0xf8] sm:$0xff]
      %v254 = vld [vmem:[%s210] sm:$0xff]
      %v255 = vld [vmem:[%s210 + $0x8] sm:$0xff]
      %v256 = vld [vmem:[%s210 + $0x10] sm:$0xff]
      %v257 = vld [vmem:[%s210 + $0x18] sm:$0xff]
      %vm290 = vcmask 1040384
      %v291 = vrot.slane %v222, 7
      %v292 = vrot.slane %v223, 7
      %v293 = vsel %vm290, %v291, %v292
      %v294 = vrot.slane %v224, 7
      %v295 = vrot.slane %v225, 7
      %v296 = vsel %vm290, %v294, %v295
      %v297 = vrot.slane %v226, 7
      %v298 = vrot.slane %v227, 7
      %v299 = vsel %vm290, %v297, %v298
      %v300 = vrot.slane %v228, 7
      %v301 = vrot.slane %v229, 7
      %v302 = vsel %vm290, %v300, %v301
      %v303 = vrot.slane %v230, 7
      %v304 = vrot.slane %v231, 7
      %v305 = vsel %vm290, %v303, %v304
      %v306 = vrot.slane %v232, 7
      %v307 = vrot.slane %v233, 7
      %v308 = vsel %vm290, %v306, %v307
      %v309 = vrot.slane %v234, 7
      %v310 = vrot.slane %v235, 7
      %v311 = vsel %vm290, %v309, %v310
      %v312 = vrot.slane %v236, 7
      %v313 = vrot.slane %v237, 7
      %v314 = vsel %vm290, %v312, %v313
      %v315 = vrot.slane %v238, 7
      %v316 = vrot.slane %v239, 7
      %v317 = vsel %vm290, %v315, %v316
      %v318 = vrot.slane %v240, 7
      %v319 = vrot.slane %v241, 7
      %v320 = vsel %vm290, %v318, %v319
      %v321 = vrot.slane %v242, 7
      %v322 = vrot.slane %v243, 7
      %v323 = vsel %vm290, %v321, %v322
      %v324 = vrot.slane %v244, 7
      %v325 = vrot.slane %v245, 7
      %v326 = vsel %vm290, %v324, %v325
      %v327 = vrot.slane %v246, 7
      %v328 = vrot.slane %v247, 7
      %v329 = vsel %vm290, %v327, %v328
      %v330 = vrot.slane %v248, 7
      %v331 = vrot.slane %v249, 7
      %v332 = vsel %vm290, %v330, %v331
      %v333 = vrot.slane %v250, 7
      %v334 = vrot.slane %v251, 7
      %v335 = vsel %vm290, %v333, %v334
      %v336 = vrot.slane %v252, 7
      %v337 = vrot.slane %v253, 7
      %v338 = vsel %vm290, %v336, %v337
      %v371 = vsel %vm290, %v222, %v291
      %v372 = vsel %vm290, %v224, %v294
      %v373 = vsel %vm290, %v226, %v297
      %v374 = vsel %vm290, %v228, %v300
      %v375 = vsel %vm290, %v230, %v303
      %v376 = vsel %vm290, %v232, %v306
      %v377 = vsel %vm290, %v234, %v309
      %v378 = vsel %vm290, %v236, %v312
      %v379 = vsel %vm290, %v238, %v315
      %v380 = vsel %vm290, %v240, %v318
      %v381 = vsel %vm290, %v242, %v321
      %v382 = vsel %vm290, %v244, %v324
      %v383 = vsel %vm290, %v246, %v327
      %v384 = vsel %vm290, %v248, %v330
      %v385 = vsel %vm290, %v250, %v333
      %v386 = vsel %vm290, %v252, %v336
      %vm387 = vcmask 1046528
      %v388 = vrot.slane %v222, 1
      %v389 = vrot.slane %v223, 1
      %v390 = vsel %vm387, %v388, %v389
      %v391 = vrot.slane %v224, 1
      %v392 = vrot.slane %v225, 1
      %v393 = vsel %vm387, %v391, %v392
      %v394 = vrot.slane %v226, 1
      %v395 = vrot.slane %v227, 1
      %v396 = vsel %vm387, %v394, %v395
      %v397 = vrot.slane %v228, 1
      %v398 = vrot.slane %v229, 1
      %v399 = vsel %vm387, %v397, %v398
      %v400 = vrot.slane %v230, 1
      %v401 = vrot.slane %v231, 1
      %v402 = vsel %vm387, %v400, %v401
      %v403 = vrot.slane %v232, 1
      %v404 = vrot.slane %v233, 1
      %v405 = vsel %vm387, %v403, %v404
      %v406 = vrot.slane %v234, 1
      %v407 = vrot.slane %v235, 1
      %v408 = vsel %vm387, %v406, %v407
      %v409 = vrot.slane %v236, 1
      %v410 = vrot.slane %v237, 1
      %v411 = vsel %vm387, %v409, %v410
      %v412 = vrot.slane %v238, 1
      %v413 = vrot.slane %v239, 1
      %v414 = vsel %vm387, %v412, %v413
      %v415 = vrot.slane %v240, 1
      %v416 = vrot.slane %v241, 1
      %v417 = vsel %vm387, %v415, %v416
      %v418 = vrot.slane %v242, 1
      %v419 = vrot.slane %v243, 1
      %v420 = vsel %vm387, %v418, %v419
      %v421 = vrot.slane %v244, 1
      %v422 = vrot.slane %v245, 1
      %v423 = vsel %vm387, %v421, %v422
      %v424 = vrot.slane %v246, 1
      %v425 = vrot.slane %v247, 1
      %v426 = vsel %vm387, %v424, %v425
      %v427 = vrot.slane %v248, 1
      %v428 = vrot.slane %v249, 1
      %v429 = vsel %vm387, %v427, %v428
      %v430 = vrot.slane %v250, 1
      %v431 = vrot.slane %v251, 1
      %v432 = vsel %vm387, %v430, %v431
      %v433 = vrot.slane %v252, 1
      %v434 = vrot.slane %v253, 1
      %v435 = vsel %vm387, %v433, %v434
      %v468 = vsel %vm387, %v389, %v223
      %v469 = vsel %vm387, %v392, %v225
      %v470 = vsel %vm387, %v395, %v227
      %v471 = vsel %vm387, %v398, %v229
      %v472 = vsel %vm387, %v401, %v231
      %v473 = vsel %vm387, %v404, %v233
      %v474 = vsel %vm387, %v407, %v235
      %v475 = vsel %vm387, %v410, %v237
      %v476 = vsel %vm387, %v413, %v239
      %v477 = vsel %vm387, %v416, %v241
      %v478 = vsel %vm387, %v419, %v243
      %v479 = vsel %vm387, %v422, %v245
      %v480 = vsel %vm387, %v425, %v247
      %v481 = vsel %vm387, %v428, %v249
      %v482 = vsel %vm387, %v431, %v251
      %v483 = vsel %vm387, %v434, %v253
      %v484 = vmul.f32 %v371, 0.25
      %v485 = vmul.f32 %v293, 0.25
      %v486 = vmul.f32 %v372, 0.25
      %v487 = vmul.f32 %v296, 0.25
      %v488 = vmul.f32 %v373, 0.25
      %v489 = vmul.f32 %v299, 0.25
      %v490 = vmul.f32 %v374, 0.25
      %v491 = vmul.f32 %v302, 0.25
      %v492 = vmul.f32 %v375, 0.25
      %v493 = vmul.f32 %v305, 0.25
      %v494 = vmul.f32 %v376, 0.25
      %v495 = vmul.f32 %v308, 0.25
      %v496 = vmul.f32 %v377, 0.25
      %v497 = vmul.f32 %v311, 0.25
      %v498 = vmul.f32 %v378, 0.25
      %v499 = vmul.f32 %v314, 0.25
      %v500 = vmul.f32 %v379, 0.25
      %v501 = vmul.f32 %v317, 0.25
      %v502 = vmul.f32 %v380, 0.25
      %v503 = vmul.f32 %v320, 0.25
      %v504 = vmul.f32 %v381, 0.25
      %v505 = vmul.f32 %v323, 0.25
      %v506 = vmul.f32 %v382, 0.25
      %v507 = vmul.f32 %v326, 0.25
      %v508 = vmul.f32 %v383, 0.25
      %v509 = vmul.f32 %v329, 0.25
      %v510 = vmul.f32 %v384, 0.25
      %v511 = vmul.f32 %v332, 0.25
      %v512 = vmul.f32 %v385, 0.25
      %v513 = vmul.f32 %v335, 0.25
      %v514 = vmul.f32 %v386, 0.25
      %v515 = vmul.f32 %v338, 0.25
      %v516 = vmul.f32 %v222, 0.75
      %v517 = vmul.f32 %v223, 0.75
      %v518 = vmul.f32 %v224, 0.75
      %v519 = vmul.f32 %v225, 0.75
      %v520 = vmul.f32 %v226, 0.75
      %v521 = vmul.f32 %v227, 0.75
      %v522 = vmul.f32 %v228, 0.75
      %v523 = vmul.f32 %v229, 0.75
      %v524 = vmul.f32 %v230, 0.75
      %v525 = vmul.f32 %v231, 0.75
      %v526 = vmul.f32 %v232, 0.75
      %v527 = vmul.f32 %v233, 0.75
      %v528 = vmul.f32 %v234, 0.75
      %v529 = vmul.f32 %v235, 0.75
      %v530 = vmul.f32 %v236, 0.75
      %v531 = vmul.f32 %v237, 0.75
      %v532 = vmul.f32 %v238, 0.75
      %v533 = vmul.f32 %v239, 0.75
      %v534 = vmul.f32 %v240, 0.75
      %v535 = vmul.f32 %v241, 0.75
      %v536 = vmul.f32 %v242, 0.75
      %v537 = vmul.f32 %v243, 0.75
      %v538 = vmul.f32 %v244, 0.75
      %v539 = vmul.f32 %v245, 0.75
      %v540 = vmul.f32 %v246, 0.75
      %v541 = vmul.f32 %v247, 0.75
      %v542 = vmul.f32 %v248, 0.75
      %v543 = vmul.f32 %v249, 0.75
      %v544 = vmul.f32 %v250, 0.75
      %v545 = vmul.f32 %v251, 0.75
      %v546 = vmul.f32 %v252, 0.75
      %v547 = vmul.f32 %v253, 0.75
      %v548 = vadd.f32 %v484, %v516
      %v549 = vadd.f32 %v485, %v517
      %v550 = vadd.f32 %v486, %v518
      %v551 = vadd.f32 %v487, %v519
      %v552 = vadd.f32 %v488, %v520
      %v553 = vadd.f32 %v489, %v521
      %v554 = vadd.f32 %v490, %v522
      %v555 = vadd.f32 %v491, %v523
      %v556 = vadd.f32 %v492, %v524
      %v557 = vadd.f32 %v493, %v525
      %v558 = vadd.f32 %v494, %v526
      %v559 = vadd.f32 %v495, %v527
      %v560 = vadd.f32 %v496, %v528
      %v561 = vadd.f32 %v497, %v529
      %v562 = vadd.f32 %v498, %v530
      %v563 = vadd.f32 %v499, %v531
      %v564 = vadd.f32 %v500, %v532
      %v565 = vadd.f32 %v501, %v533
      %v566 = vadd.f32 %v502, %v534
      %v567 = vadd.f32 %v503, %v535
      %v568 = vadd.f32 %v504, %v536
      %v569 = vadd.f32 %v505, %v537
      %v570 = vadd.f32 %v506, %v538
      %v571 = vadd.f32 %v507, %v539
      %v572 = vadd.f32 %v508, %v540
      %v573 = vadd.f32 %v509, %v541
      %v574 = vadd.f32 %v510, %v542
      %v575 = vadd.f32 %v511, %v543
      %v576 = vadd.f32 %v512, %v544
      %v577 = vadd.f32 %v513, %v545
      %v578 = vadd.f32 %v514, %v546
      %v579 = vadd.f32 %v515, %v547
      %v580 = vmul.f32 %v390, 0.25
      %v581 = vmul.f32 %v468, 0.25
      %v582 = vmul.f32 %v393, 0.25
      %v583 = vmul.f32 %v469, 0.25
      %v584 = vmul.f32 %v396, 0.25
      %v585 = vmul.f32 %v470, 0.25
      %v586 = vmul.f32 %v399, 0.25
      %v587 = vmul.f32 %v471, 0.25
      %v588 = vmul.f32 %v402, 0.25
      %v589 = vmul.f32 %v472, 0.25
      %v590 = vmul.f32 %v405, 0.25
      %v591 = vmul.f32 %v473, 0.25
      %v592 = vmul.f32 %v408, 0.25
      %v593 = vmul.f32 %v474, 0.25
      %v594 = vmul.f32 %v411, 0.25
      %v595 = vmul.f32 %v475, 0.25
      %v596 = vmul.f32 %v414, 0.25
      %v597 = vmul.f32 %v476, 0.25
      %v598 = vmul.f32 %v417, 0.25
      %v599 = vmul.f32 %v477, 0.25
      %v600 = vmul.f32 %v420, 0.25
      %v601 = vmul.f32 %v478, 0.25
      %v602 = vmul.f32 %v423, 0.25
      %v603 = vmul.f32 %v479, 0.25
      %v604 = vmul.f32 %v426, 0.25
      %v605 = vmul.f32 %v480, 0.25
      %v606 = vmul.f32 %v429, 0.25
      %v607 = vmul.f32 %v481, 0.25
      %v608 = vmul.f32 %v432, 0.25
      %v609 = vmul.f32 %v482, 0.25
      %v610 = vmul.f32 %v435, 0.25
      %v611 = vmul.f32 %v483, 0.25
      %v612 = vadd.f32 %v516, %v580
      %v613 = vadd.f32 %v517, %v581
      %v614 = vadd.f32 %v518, %v582
      %v615 = vadd.f32 %v519, %v583
      %v616 = vadd.f32 %v520, %v584
      %v617 = vadd.f32 %v521, %v585
      %v618 = vadd.f32 %v522, %v586
      %v619 = vadd.f32 %v523, %v587
      %v620 = vadd.f32 %v524, %v588
      %v621 = vadd.f32 %v525, %v589
      %v622 = vadd.f32 %v526, %v590
      %v623 = vadd.f32 %v527, %v591
      %v624 = vadd.f32 %v528, %v592
      %v625 = vadd.f32 %v529, %v593
      %v626 = vadd.f32 %v530, %v594
      %v627 = vadd.f32 %v531, %v595
      %v628 = vadd.f32 %v532, %v596
      %v629 = vadd.f32 %v533, %v597
      %v630 = vadd.f32 %v534, %v598
      %v631 = vadd.f32 %v535, %v599
      %v632 = vadd.f32 %v536, %v600
      %v633 = vadd.f32 %v537, %v601
      %v634 = vadd.f32 %v538, %v602
      %v635 = vadd.f32 %v539, %v603
      %v636 = vadd.f32 %v540, %v604
      %v637 = vadd.f32 %v541, %v605
      %v638 = vadd.f32 %v542, %v606
      %v639 = vadd.f32 %v543, %v607
      %v640 = vadd.f32 %v544, %v608
      %v641 = vadd.f32 %v545, %v609
      %v642 = vadd.f32 %v546, %v610
      %v643 = vadd.f32 %v547, %v611
      %v648 = vrot.slane %v254, 7
      %v649 = vrot.slane %v255, 7
      %v650 = vsel %vm290, %v648, %v649
      %v651 = vrot.slane %v256, 7
      %v652 = vrot.slane %v257, 7
      %v653 = vsel %vm290, %v651, %v652
      %v658 = vsel %vm290, %v254, %v648
      %v659 = vsel %vm290, %v256, %v651
      %v660 = vrot.slane %v254, 1
      %v661 = vrot.slane %v255, 1
      %v662 = vsel %vm387, %v660, %v661
      %v663 = vrot.slane %v256, 1
      %v664 = vrot.slane %v257, 1
      %v665 = vsel %vm387, %v663, %v664
      %v670 = vsel %vm387, %v661, %v255
      %v671 = vsel %vm387, %v664, %v257
      %v672 = vmul.f32 %v658, 0.25
      %v673 = vmul.f32 %v650, 0.25
      %v674 = vmul.f32 %v659, 0.25
      %v675 = vmul.f32 %v653, 0.25
      %v676 = vmul.f32 %v254, 0.75
      %v677 = vmul.f32 %v255, 0.75
      %v678 = vmul.f32 %v256, 0.75
      %v679 = vmul.f32 %v257, 0.75
      %v680 = vadd.f32 %v672, %v676
      %v681 = vadd.f32 %v673, %v677
      %v682 = vadd.f32 %v674, %v678
      %v683 = vadd.f32 %v675, %v679
      %v684 = vmul.f32 %v662, 0.25
      %v685 = vmul.f32 %v670, 0.25
      %v686 = vmul.f32 %v665, 0.25
      %v687 = vmul.f32 %v671, 0.25
      %v688 = vadd.f32 %v676, %v684
      %v689 = vadd.f32 %v677, %v685
      %v690 = vadd.f32 %v678, %v686
      %v691 = vadd.f32 %v679, %v687
      %v692 = vmul.f32 %v680, 0.25
      %v693 = vmul.f32 %v681, 0.25
      %v694 = vmul.f32 %v548, 0.75
      %v695 = vmul.f32 %v549, 0.75
      %v696 = vadd.f32 %v692, %v694
      %v697 = vadd.f32 %v693, %v695
      %vm698 = vcmask 31744
      %699 = vst.msk [vmem:[%s220] sm:$0xff] %vm698, %v696
      %700 = vst.msk [vmem:[%s220 + $0x8] sm:$0xff] %vm698, %v697
      %v701 = vmul.f32 %v688, 0.25
      %v702 = vmul.f32 %v689, 0.25
      %v703 = vmul.f32 %v612, 0.75
      %v704 = vmul.f32 %v613, 0.75
      %v705 = vadd.f32 %v701, %v703
      %v706 = vadd.f32 %v702, %v704
      %709 = vrot.lane.b32.xlu0 %v705, 4
      %v710 = vpop.permute.xlu0 %709
      %711 = vrot.lane.b32.xlu0 %v706, 4
      %v712 = vpop.permute.xlu0 %711
      %vm715 = vcmask 64544
      %716 = vst.msk [vmem:[%s220] sm:$0xff] %vm715, %v710
      %717 = vst.msk [vmem:[%s220 + $0x8] sm:$0xff] %vm715, %v712
      %v718 = vmul.f32 %v578, 0.75
      %v719 = vmul.f32 %v579, 0.75
      %v720 = vmul.f32 %v682, 0.25
      %v721 = vmul.f32 %v683, 0.25
      %v722 = vadd.f32 %v718, %v720
      %v723 = vadd.f32 %v719, %v721
      %s724 = scalar_lea.vmem %s220, 496
      %725 = vst.msk [vmem:[%s724] sm:$0xff] %vm698, %v722
      %726 = vst.msk [vmem:[%s724 + $0x8] sm:$0xff] %vm698, %v723
      %v727 = vmul.f32 %v642, 0.75
      %v728 = vmul.f32 %v643, 0.75
      %v729 = vmul.f32 %v690, 0.25
      %v730 = vmul.f32 %v691, 0.25
      %v731 = vadd.f32 %v727, %v729
      %v732 = vadd.f32 %v728, %v730
      %735 = vrot.lane.b32.xlu0 %v731, 4
      %v736 = vpop.permute.xlu0 %735
      %737 = vrot.lane.b32.xlu0 %v732, 4
      %v738 = vpop.permute.xlu0 %737
      %741 = vst.msk [vmem:[%s724] sm:$0xff] %vm715, %v736
      %742 = vst.msk [vmem:[%s724 + $0x8] sm:$0xff] %vm715, %v738
      %v743 = vmul.f32 %v548, 0.25
      %v744 = vmul.f32 %v549, 0.25
      %v745 = vmul.f32 %v550, 0.25
      %v746 = vmul.f32 %v551, 0.25
      %v747 = vmul.f32 %v552, 0.25
      %v748 = vmul.f32 %v553, 0.25
      %v749 = vmul.f32 %v554, 0.25
      %v750 = vmul.f32 %v555, 0.25
      %v751 = vmul.f32 %v556, 0.25
      %v752 = vmul.f32 %v557, 0.25
      %v753 = vmul.f32 %v558, 0.25
      %v754 = vmul.f32 %v559, 0.25
      %v755 = vmul.f32 %v560, 0.25
      %v756 = vmul.f32 %v561, 0.25
      %v757 = vmul.f32 %v562, 0.25
      %v758 = vmul.f32 %v563, 0.25
      %v759 = vmul.f32 %v564, 0.25
      %v760 = vmul.f32 %v565, 0.25
      %v761 = vmul.f32 %v566, 0.25
      %v762 = vmul.f32 %v567, 0.25
      %v763 = vmul.f32 %v568, 0.25
      %v764 = vmul.f32 %v569, 0.25
      %v765 = vmul.f32 %v570, 0.25
      %v766 = vmul.f32 %v571, 0.25
      %v767 = vmul.f32 %v572, 0.25
      %v768 = vmul.f32 %v573, 0.25
      %v769 = vmul.f32 %v574, 0.25
      %v770 = vmul.f32 %v575, 0.25
      %v771 = vmul.f32 %v576, 0.25
      %v772 = vmul.f32 %v577, 0.25
      %v773 = vmul.f32 %v550, 0.75
      %v774 = vmul.f32 %v551, 0.75
      %v775 = vmul.f32 %v552, 0.75
      %v776 = vmul.f32 %v553, 0.75
      %v777 = vmul.f32 %v554, 0.75
      %v778 = vmul.f32 %v555, 0.75
      %v779 = vmul.f32 %v556, 0.75
      %v780 = vmul.f32 %v557, 0.75
      %v781 = vmul.f32 %v558, 0.75
      %v782 = vmul.f32 %v559, 0.75
      %v783 = vmul.f32 %v560, 0.75
      %v784 = vmul.f32 %v561, 0.75
      %v785 = vmul.f32 %v562, 0.75
      %v786 = vmul.f32 %v563, 0.75
      %v787 = vmul.f32 %v564, 0.75
      %v788 = vmul.f32 %v565, 0.75
      %v789 = vmul.f32 %v566, 0.75
      %v790 = vmul.f32 %v567, 0.75
      %v791 = vmul.f32 %v568, 0.75
      %v792 = vmul.f32 %v569, 0.75
      %v793 = vmul.f32 %v570, 0.75
      %v794 = vmul.f32 %v571, 0.75
      %v795 = vmul.f32 %v572, 0.75
      %v796 = vmul.f32 %v573, 0.75
      %v797 = vmul.f32 %v574, 0.75
      %v798 = vmul.f32 %v575, 0.75
      %v799 = vmul.f32 %v576, 0.75
      %v800 = vmul.f32 %v577, 0.75
      %v801 = vadd.f32 %v743, %v773
      %v802 = vadd.f32 %v744, %v774
      %v803 = vadd.f32 %v745, %v775
      %v804 = vadd.f32 %v746, %v776
      %v805 = vadd.f32 %v747, %v777
      %v806 = vadd.f32 %v748, %v778
      %v807 = vadd.f32 %v749, %v779
      %v808 = vadd.f32 %v750, %v780
      %v809 = vadd.f32 %v751, %v781
      %v810 = vadd.f32 %v752, %v782
      %v811 = vadd.f32 %v753, %v783
      %v812 = vadd.f32 %v754, %v784
      %v813 = vadd.f32 %v755, %v785
      %v814 = vadd.f32 %v756, %v786
      %v815 = vadd.f32 %v757, %v787
      %v816 = vadd.f32 %v758, %v788
      %v817 = vadd.f32 %v759, %v789
      %v818 = vadd.f32 %v760, %v790
      %v819 = vadd.f32 %v761, %v791
      %v820 = vadd.f32 %v762, %v792
      %v821 = vadd.f32 %v763, %v793
      %v822 = vadd.f32 %v764, %v794
      %v823 = vadd.f32 %v765, %v795
      %v824 = vadd.f32 %v766, %v796
      %v825 = vadd.f32 %v767, %v797
      %v826 = vadd.f32 %v768, %v798
      %v827 = vadd.f32 %v769, %v799
      %v828 = vadd.f32 %v770, %v800
      %v829 = vadd.f32 %v771, %v718
      %v830 = vadd.f32 %v772, %v719
      %s831 = scalar_lea.vmem %s220, 32
      %832 = vst.msk [vmem:[%s831] sm:$0xff] %vm698, %v801
      %833 = vst.msk [vmem:[%s831 + $0x8] sm:$0xff] %vm698, %v802
      %834 = vst.msk [vmem:[%s831 + $0x20] sm:$0xff] %vm698, %v803
      %835 = vst.msk [vmem:[%s831 + $0x28] sm:$0xff] %vm698, %v804
      %836 = vst.msk [vmem:[%s831 + $0x40] sm:$0xff] %vm698, %v805
      %837 = vst.msk [vmem:[%s831 + $0x48] sm:$0xff] %vm698, %v806
      %838 = vst.msk [vmem:[%s831 + $0x60] sm:$0xff] %vm698, %v807
      %839 = vst.msk [vmem:[%s831 + $0x68] sm:$0xff] %vm698, %v808
      %840 = vst.msk [vmem:[%s831 + $0x80] sm:$0xff] %vm698, %v809
      %841 = vst.msk [vmem:[%s831 + $0x88] sm:$0xff] %vm698, %v810
      %842 = vst.msk [vmem:[%s831 + $0xa0] sm:$0xff] %vm698, %v811
      %843 = vst.msk [vmem:[%s831 + $0xa8] sm:$0xff] %vm698, %v812
      %844 = vst.msk [vmem:[%s831 + $0xc0] sm:$0xff] %vm698, %v813
      %845 = vst.msk [vmem:[%s831 + $0xc8] sm:$0xff] %vm698, %v814
      %846 = vst.msk [vmem:[%s831 + $0xe0] sm:$0xff] %vm698, %v815
      %847 = vst.msk [vmem:[%s831 + $0xe8] sm:$0xff] %vm698, %v816
      %848 = vst.msk [vmem:[%s831 + $0x100] sm:$0xff] %vm698, %v817
      %849 = vst.msk [vmem:[%s831 + $0x108] sm:$0xff] %vm698, %v818
      %850 = vst.msk [vmem:[%s831 + $0x120] sm:$0xff] %vm698, %v819
      %851 = vst.msk [vmem:[%s831 + $0x128] sm:$0xff] %vm698, %v820
      %852 = vst.msk [vmem:[%s831 + $0x140] sm:$0xff] %vm698, %v821
      %853 = vst.msk [vmem:[%s831 + $0x148] sm:$0xff] %vm698, %v822
      %854 = vst.msk [vmem:[%s831 + $0x160] sm:$0xff] %vm698, %v823
      %855 = vst.msk [vmem:[%s831 + $0x168] sm:$0xff] %vm698, %v824
      %856 = vst.msk [vmem:[%s831 + $0x180] sm:$0xff] %vm698, %v825
      %857 = vst.msk [vmem:[%s831 + $0x188] sm:$0xff] %vm698, %v826
      %858 = vst.msk [vmem:[%s831 + $0x1a0] sm:$0xff] %vm698, %v827
      %859 = vst.msk [vmem:[%s831 + $0x1a8] sm:$0xff] %vm698, %v828
      %860 = vst.msk [vmem:[%s831 + $0x1c0] sm:$0xff] %vm698, %v829
      %861 = vst.msk [vmem:[%s831 + $0x1c8] sm:$0xff] %vm698, %v830
      %v862 = vmul.f32 %v612, 0.25
      %v863 = vmul.f32 %v613, 0.25
      %v864 = vmul.f32 %v614, 0.25
      %v865 = vmul.f32 %v615, 0.25
      %v866 = vmul.f32 %v616, 0.25
      %v867 = vmul.f32 %v617, 0.25
      %v868 = vmul.f32 %v618, 0.25
      %v869 = vmul.f32 %v619, 0.25
      %v870 = vmul.f32 %v620, 0.25
      %v871 = vmul.f32 %v621, 0.25
      %v872 = vmul.f32 %v622, 0.25
      %v873 = vmul.f32 %v623, 0.25
      %v874 = vmul.f32 %v624, 0.25
      %v875 = vmul.f32 %v625, 0.25
      %v876 = vmul.f32 %v626, 0.25
      %v877 = vmul.f32 %v627, 0.25
      %v878 = vmul.f32 %v628, 0.25
      %v879 = vmul.f32 %v629, 0.25
      %v880 = vmul.f32 %v630, 0.25
      %v881 = vmul.f32 %v631, 0.25
      %v882 = vmul.f32 %v632, 0.25
      %v883 = vmul.f32 %v633, 0.25
      %v884 = vmul.f32 %v634, 0.25
      %v885 = vmul.f32 %v635, 0.25
      %v886 = vmul.f32 %v636, 0.25
      %v887 = vmul.f32 %v637, 0.25
      %v888 = vmul.f32 %v638, 0.25
      %v889 = vmul.f32 %v639, 0.25
      %v890 = vmul.f32 %v640, 0.25
      %v891 = vmul.f32 %v641, 0.25
      %v892 = vmul.f32 %v614, 0.75
      %v893 = vmul.f32 %v615, 0.75
      %v894 = vmul.f32 %v616, 0.75
      %v895 = vmul.f32 %v617, 0.75
      %v896 = vmul.f32 %v618, 0.75
      %v897 = vmul.f32 %v619, 0.75
      %v898 = vmul.f32 %v620, 0.75
      %v899 = vmul.f32 %v621, 0.75
      %v900 = vmul.f32 %v622, 0.75
      %v901 = vmul.f32 %v623, 0.75
      %v902 = vmul.f32 %v624, 0.75
      %v903 = vmul.f32 %v625, 0.75
      %v904 = vmul.f32 %v626, 0.75
      %v905 = vmul.f32 %v627, 0.75
      %v906 = vmul.f32 %v628, 0.75
      %v907 = vmul.f32 %v629, 0.75
      %v908 = vmul.f32 %v630, 0.75
      %v909 = vmul.f32 %v631, 0.75
      %v910 = vmul.f32 %v632, 0.75
      %v911 = vmul.f32 %v633, 0.75
      %v912 = vmul.f32 %v634, 0.75
      %v913 = vmul.f32 %v635, 0.75
      %v914 = vmul.f32 %v636, 0.75
      %v915 = vmul.f32 %v637, 0.75
      %v916 = vmul.f32 %v638, 0.75
      %v917 = vmul.f32 %v639, 0.75
      %v918 = vmul.f32 %v640, 0.75
      %v919 = vmul.f32 %v641, 0.75
      %v920 = vadd.f32 %v862, %v892
      %v921 = vadd.f32 %v863, %v893
      %v922 = vadd.f32 %v864, %v894
      %v923 = vadd.f32 %v865, %v895
      %v924 = vadd.f32 %v866, %v896
      %v925 = vadd.f32 %v867, %v897
      %v926 = vadd.f32 %v868, %v898
      %v927 = vadd.f32 %v869, %v899
      %v928 = vadd.f32 %v870, %v900
      %v929 = vadd.f32 %v871, %v901
      %v930 = vadd.f32 %v872, %v902
      %v931 = vadd.f32 %v873, %v903
      %v932 = vadd.f32 %v874, %v904
      %v933 = vadd.f32 %v875, %v905
      %v934 = vadd.f32 %v876, %v906
      %v935 = vadd.f32 %v877, %v907
      %v936 = vadd.f32 %v878, %v908
      %v937 = vadd.f32 %v879, %v909
      %v938 = vadd.f32 %v880, %v910
      %v939 = vadd.f32 %v881, %v911
      %v940 = vadd.f32 %v882, %v912
      %v941 = vadd.f32 %v883, %v913
      %v942 = vadd.f32 %v884, %v914
      %v943 = vadd.f32 %v885, %v915
      %v944 = vadd.f32 %v886, %v916
      %v945 = vadd.f32 %v887, %v917
      %v946 = vadd.f32 %v888, %v918
      %v947 = vadd.f32 %v889, %v919
      %v948 = vadd.f32 %v890, %v727
      %v949 = vadd.f32 %v891, %v728
      %980 = vrot.lane.b32.xlu0 %v920, 4
      %v981 = vpop.permute.xlu0 %980
      %982 = vrot.lane.b32.xlu0 %v921, 4
      %v983 = vpop.permute.xlu0 %982
      %984 = vrot.lane.b32.xlu0 %v922, 4
      %v985 = vpop.permute.xlu0 %984
      %986 = vrot.lane.b32.xlu0 %v923, 4
      %v987 = vpop.permute.xlu0 %986
      %988 = vrot.lane.b32.xlu0 %v924, 4
      %v989 = vpop.permute.xlu0 %988
      %990 = vrot.lane.b32.xlu0 %v925, 4
      %v991 = vpop.permute.xlu0 %990
      %992 = vrot.lane.b32.xlu0 %v926, 4
      %v993 = vpop.permute.xlu0 %992
      %994 = vrot.lane.b32.xlu0 %v927, 4
      %v995 = vpop.permute.xlu0 %994
      %996 = vrot.lane.b32.xlu0 %v928, 4
      %v997 = vpop.permute.xlu0 %996
      %998 = vrot.lane.b32.xlu0 %v929, 4
      %v999 = vpop.permute.xlu0 %998
      %1000 = vrot.lane.b32.xlu0 %v930, 4
      %v1001 = vpop.permute.xlu0 %1000
      %1002 = vrot.lane.b32.xlu0 %v931, 4
      %v1003 = vpop.permute.xlu0 %1002
      %1004 = vrot.lane.b32.xlu0 %v932, 4
      %v1005 = vpop.permute.xlu0 %1004
      %1006 = vrot.lane.b32.xlu0 %v933, 4
      %v1007 = vpop.permute.xlu0 %1006
      %1008 = vrot.lane.b32.xlu0 %v934, 4
      %v1009 = vpop.permute.xlu0 %1008
      %1010 = vrot.lane.b32.xlu0 %v935, 4
      %v1011 = vpop.permute.xlu0 %1010
      %1012 = vrot.lane.b32.xlu0 %v936, 4
      %v1013 = vpop.permute.xlu0 %1012
      %1014 = vrot.lane.b32.xlu0 %v937, 4
      %v1015 = vpop.permute.xlu0 %1014
      %1016 = vrot.lane.b32.xlu0 %v938, 4
      %v1017 = vpop.permute.xlu0 %1016
      %1018 = vrot.lane.b32.xlu0 %v939, 4
      %v1019 = vpop.permute.xlu0 %1018
      %1020 = vrot.lane.b32.xlu0 %v940, 4
      %v1021 = vpop.permute.xlu0 %1020
      %1022 = vrot.lane.b32.xlu0 %v941, 4
      %v1023 = vpop.permute.xlu0 %1022
      %1024 = vrot.lane.b32.xlu0 %v942, 4
      %v1025 = vpop.permute.xlu0 %1024
      %1026 = vrot.lane.b32.xlu0 %v943, 4
      %v1027 = vpop.permute.xlu0 %1026
      %1028 = vrot.lane.b32.xlu0 %v944, 4
      %v1029 = vpop.permute.xlu0 %1028
      %1030 = vrot.lane.b32.xlu0 %v945, 4
      %v1031 = vpop.permute.xlu0 %1030
      %1032 = vrot.lane.b32.xlu0 %v946, 4
      %v1033 = vpop.permute.xlu0 %1032
      %1034 = vrot.lane.b32.xlu0 %v947, 4
      %v1035 = vpop.permute.xlu0 %1034
      %1036 = vrot.lane.b32.xlu0 %v948, 4
      %v1037 = vpop.permute.xlu0 %1036
      %1038 = vrot.lane.b32.xlu0 %v949, 4
      %v1039 = vpop.permute.xlu0 %1038
      %1070 = vst.msk [vmem:[%s831] sm:$0xff] %vm715, %v981
      %1071 = vst.msk [vmem:[%s831 + $0x8] sm:$0xff] %vm715, %v983
      %1072 = vst.msk [vmem:[%s831 + $0x20] sm:$0xff] %vm715, %v985
      %1073 = vst.msk [vmem:[%s831 + $0x28] sm:$0xff] %vm715, %v987
      %1074 = vst.msk [vmem:[%s831 + $0x40] sm:$0xff] %vm715, %v989
      %1075 = vst.msk [vmem:[%s831 + $0x48] sm:$0xff] %vm715, %v991
      %1076 = vst.msk [vmem:[%s831 + $0x60] sm:$0xff] %vm715, %v993
      %1077 = vst.msk [vmem:[%s831 + $0x68] sm:$0xff] %vm715, %v995
      %1078 = vst.msk [vmem:[%s831 + $0x80] sm:$0xff] %vm715, %v997
      %1079 = vst.msk [vmem:[%s831 + $0x88] sm:$0xff] %vm715, %v999
      %1080 = vst.msk [vmem:[%s831 + $0xa0] sm:$0xff] %vm715, %v1001
      %1081 = vst.msk [vmem:[%s831 + $0xa8] sm:$0xff] %vm715, %v1003
      %1082 = vst.msk [vmem:[%s831 + $0xc0] sm:$0xff] %vm715, %v1005
      %1083 = vst.msk [vmem:[%s831 + $0xc8] sm:$0xff] %vm715, %v1007
      %1084 = vst.msk [vmem:[%s831 + $0xe0] sm:$0xff] %vm715, %v1009
      %1085 = vst.msk [vmem:[%s831 + $0xe8] sm:$0xff] %vm715, %v1011
      %1086 = vst.msk [vmem:[%s831 + $0x100] sm:$0xff] %vm715, %v1013
      %1087 = vst.msk [vmem:[%s831 + $0x108] sm:$0xff] %vm715, %v1015
      %1088 = vst.msk [vmem:[%s831 + $0x120] sm:$0xff] %vm715, %v1017
      %1089 = vst.msk [vmem:[%s831 + $0x128] sm:$0xff] %vm715, %v1019
      %1090 = vst.msk [vmem:[%s831 + $0x140] sm:$0xff] %vm715, %v1021
      %1091 = vst.msk [vmem:[%s831 + $0x148] sm:$0xff] %vm715, %v1023
      %1092 = vst.msk [vmem:[%s831 + $0x160] sm:$0xff] %vm715, %v1025
      %1093 = vst.msk [vmem:[%s831 + $0x168] sm:$0xff] %vm715, %v1027
      %1094 = vst.msk [vmem:[%s831 + $0x180] sm:$0xff] %vm715, %v1029
      %1095 = vst.msk [vmem:[%s831 + $0x188] sm:$0xff] %vm715, %v1031
      %1096 = vst.msk [vmem:[%s831 + $0x1a0] sm:$0xff] %vm715, %v1033
      %1097 = vst.msk [vmem:[%s831 + $0x1a8] sm:$0xff] %vm715, %v1035
      %1098 = vst.msk [vmem:[%s831 + $0x1c0] sm:$0xff] %vm715, %v1037
      %1099 = vst.msk [vmem:[%s831 + $0x1c8] sm:$0xff] %vm715, %v1039
      %v1100 = vmul.f32 %v578, 0.25
      %v1101 = vmul.f32 %v579, 0.25
      %v1102 = vadd.f32 %v694, %v745
      %v1103 = vadd.f32 %v695, %v746
      %v1104 = vadd.f32 %v773, %v747
      %v1105 = vadd.f32 %v774, %v748
      %v1106 = vadd.f32 %v775, %v749
      %v1107 = vadd.f32 %v776, %v750
      %v1108 = vadd.f32 %v777, %v751
      %v1109 = vadd.f32 %v778, %v752
      %v1110 = vadd.f32 %v779, %v753
      %v1111 = vadd.f32 %v780, %v754
      %v1112 = vadd.f32 %v781, %v755
      %v1113 = vadd.f32 %v782, %v756
      %v1114 = vadd.f32 %v783, %v757
      %v1115 = vadd.f32 %v784, %v758
      %v1116 = vadd.f32 %v785, %v759
      %v1117 = vadd.f32 %v786, %v760
      %v1118 = vadd.f32 %v787, %v761
      %v1119 = vadd.f32 %v788, %v762
      %v1120 = vadd.f32 %v789, %v763
      %v1121 = vadd.f32 %v790, %v764
      %v1122 = vadd.f32 %v791, %v765
      %v1123 = vadd.f32 %v792, %v766
      %v1124 = vadd.f32 %v793, %v767
      %v1125 = vadd.f32 %v794, %v768
      %v1126 = vadd.f32 %v795, %v769
      %v1127 = vadd.f32 %v796, %v770
      %v1128 = vadd.f32 %v797, %v771
      %v1129 = vadd.f32 %v798, %v772
      %v1130 = vadd.f32 %v799, %v1100
      %v1131 = vadd.f32 %v800, %v1101
      %s1132 = scalar_lea.vmem %s220, 16
      %1133 = vst.msk [vmem:[%s1132] sm:$0xff] %vm698, %v1102
      %1134 = vst.msk [vmem:[%s1132 + $0x8] sm:$0xff] %vm698, %v1103
      %1135 = vst.msk [vmem:[%s1132 + $0x20] sm:$0xff] %vm698, %v1104
      %1136 = vst.msk [vmem:[%s1132 + $0x28] sm:$0xff] %vm698, %v1105
      %1137 = vst.msk [vmem:[%s1132 + $0x40] sm:$0xff] %vm698, %v1106
      %1138 = vst.msk [vmem:[%s1132 + $0x48] sm:$0xff] %vm698, %v1107
      %1139 = vst.msk [vmem:[%s1132 + $0x60] sm:$0xff] %vm698, %v1108
      %1140 = vst.msk [vmem:[%s1132 + $0x68] sm:$0xff] %vm698, %v1109
      %1141 = vst.msk [vmem:[%s1132 + $0x80] sm:$0xff] %vm698, %v1110
      %1142 = vst.msk [vmem:[%s1132 + $0x88] sm:$0xff] %vm698, %v1111
      %1143 = vst.msk [vmem:[%s1132 + $0xa0] sm:$0xff] %vm698, %v1112
      %1144 = vst.msk [vmem:[%s1132 + $0xa8] sm:$0xff] %vm698, %v1113
      %1145 = vst.msk [vmem:[%s1132 + $0xc0] sm:$0xff] %vm698, %v1114
      %1146 = vst.msk [vmem:[%s1132 + $0xc8] sm:$0xff] %vm698, %v1115
      %1147 = vst.msk [vmem:[%s1132 + $0xe0] sm:$0xff] %vm698, %v1116
      %1148 = vst.msk [vmem:[%s1132 + $0xe8] sm:$0xff] %vm698, %v1117
      %1149 = vst.msk [vmem:[%s1132 + $0x100] sm:$0xff] %vm698, %v1118
      %1150 = vst.msk [vmem:[%s1132 + $0x108] sm:$0xff] %vm698, %v1119
      %1151 = vst.msk [vmem:[%s1132 + $0x120] sm:$0xff] %vm698, %v1120
      %1152 = vst.msk [vmem:[%s1132 + $0x128] sm:$0xff] %vm698, %v1121
      %1153 = vst.msk [vmem:[%s1132 + $0x140] sm:$0xff] %vm698, %v1122
      %1154 = vst.msk [vmem:[%s1132 + $0x148] sm:$0xff] %vm698, %v1123
      %1155 = vst.msk [vmem:[%s1132 + $0x160] sm:$0xff] %vm698, %v1124
      %1156 = vst.msk [vmem:[%s1132 + $0x168] sm:$0xff] %vm698, %v1125
      %1157 = vst.msk [vmem:[%s1132 + $0x180] sm:$0xff] %vm698, %v1126
      %1158 = vst.msk [vmem:[%s1132 + $0x188] sm:$0xff] %vm698, %v1127
      %1159 = vst.msk [vmem:[%s1132 + $0x1a0] sm:$0xff] %vm698, %v1128
      %1160 = vst.msk [vmem:[%s1132 + $0x1a8] sm:$0xff] %vm698, %v1129
      %1161 = vst.msk [vmem:[%s1132 + $0x1c0] sm:$0xff] %vm698, %v1130
      %1162 = vst.msk [vmem:[%s1132 + $0x1c8] sm:$0xff] %vm698, %v1131
      %v1163 = vmul.f32 %v642, 0.25
      %v1164 = vmul.f32 %v643, 0.25
      %v1165 = vadd.f32 %v703, %v864
      %v1166 = vadd.f32 %v704, %v865
      %v1167 = vadd.f32 %v892, %v866
      %v1168 = vadd.f32 %v893, %v867
      %v1169 = vadd.f32 %v894, %v868
      %v1170 = vadd.f32 %v895, %v869
      %v1171 = vadd.f32 %v896, %v870
      %v1172 = vadd.f32 %v897, %v871
      %v1173 = vadd.f32 %v898, %v872
      %v1174 = vadd.f32 %v899, %v873
      %v1175 = vadd.f32 %v900, %v874
      %v1176 = vadd.f32 %v901, %v875
      %v1177 = vadd.f32 %v902, %v876
      %v1178 = vadd.f32 %v903, %v877
      %v1179 = vadd.f32 %v904, %v878
      %v1180 = vadd.f32 %v905, %v879
      %v1181 = vadd.f32 %v906, %v880
      %v1182 = vadd.f32 %v907, %v881
      %v1183 = vadd.f32 %v908, %v882
      %v1184 = vadd.f32 %v909, %v883
      %v1185 = vadd.f32 %v910, %v884
      %v1186 = vadd.f32 %v911, %v885
      %v1187 = vadd.f32 %v912, %v886
      %v1188 = vadd.f32 %v913, %v887
      %v1189 = vadd.f32 %v914, %v888
      %v1190 = vadd.f32 %v915, %v889
      %v1191 = vadd.f32 %v916, %v890
      %v1192 = vadd.f32 %v917, %v891
      %v1193 = vadd.f32 %v918, %v1163
      %v1194 = vadd.f32 %v919, %v1164
      %1225 = vrot.lane.b32.xlu0 %v1165, 4
      %v1226 = vpop.permute.xlu0 %1225
      %1227 = vrot.lane.b32.xlu0 %v1166, 4
      %v1228 = vpop.permute.xlu0 %1227
      %1229 = vrot.lane.b32.xlu0 %v1167, 4
      %v1230 = vpop.permute.xlu0 %1229
      %1231 = vrot.lane.b32.xlu0 %v1168, 4
      %v1232 = vpop.permute.xlu0 %1231
      %1233 = vrot.lane.b32.xlu0 %v1169, 4
      %v1234 = vpop.permute.xlu0 %1233
      %1235 = vrot.lane.b32.xlu0 %v1170, 4
      %v1236 = vpop.permute.xlu0 %1235
      %1237 = vrot.lane.b32.xlu0 %v1171, 4
      %v1238 = vpop.permute.xlu0 %1237
      %1239 = vrot.lane.b32.xlu0 %v1172, 4
      %v1240 = vpop.permute.xlu0 %1239
      %1241 = vrot.lane.b32.xlu0 %v1173, 4
      %v1242 = vpop.permute.xlu0 %1241
      %1243 = vrot.lane.b32.xlu0 %v1174, 4
      %v1244 = vpop.permute.xlu0 %1243
      %1245 = vrot.lane.b32.xlu0 %v1175, 4
      %v1246 = vpop.permute.xlu0 %1245
      %1247 = vrot.lane.b32.xlu0 %v1176, 4
      %v1248 = vpop.permute.xlu0 %1247
      %1249 = vrot.lane.b32.xlu0 %v1177, 4
      %v1250 = vpop.permute.xlu0 %1249
      %1251 = vrot.lane.b32.xlu0 %v1178, 4
      %v1252 = vpop.permute.xlu0 %1251
      %1253 = vrot.lane.b32.xlu0 %v1179, 4
      %v1254 = vpop.permute.xlu0 %1253
      %1255 = vrot.lane.b32.xlu0 %v1180, 4
      %v1256 = vpop.permute.xlu0 %1255
      %1257 = vrot.lane.b32.xlu0 %v1181, 4
      %v1258 = vpop.permute.xlu0 %1257
      %1259 = vrot.lane.b32.xlu0 %v1182, 4
      %v1260 = vpop.permute.xlu0 %1259
      %1261 = vrot.lane.b32.xlu0 %v1183, 4
      %v1262 = vpop.permute.xlu0 %1261
      %1263 = vrot.lane.b32.xlu0 %v1184, 4
      %v1264 = vpop.permute.xlu0 %1263
      %1265 = vrot.lane.b32.xlu0 %v1185, 4
      %v1266 = vpop.permute.xlu0 %1265
      %1267 = vrot.lane.b32.xlu0 %v1186, 4
      %v1268 = vpop.permute.xlu0 %1267
      %1269 = vrot.lane.b32.xlu0 %v1187, 4
      %v1270 = vpop.permute.xlu0 %1269
      %1271 = vrot.lane.b32.xlu0 %v1188, 4
      %v1272 = vpop.permute.xlu0 %1271
      %1273 = vrot.lane.b32.xlu0 %v1189, 4
      %v1274 = vpop.permute.xlu0 %1273
      %1275 = vrot.lane.b32.xlu0 %v1190, 4
      %v1276 = vpop.permute.xlu0 %1275
      %1277 = vrot.lane.b32.xlu0 %v1191, 4
      %v1278 = vpop.permute.xlu0 %1277
      %1279 = vrot.lane.b32.xlu0 %v1192, 4
      %v1280 = vpop.permute.xlu0 %1279
      %1281 = vrot.lane.b32.xlu0 %v1193, 4
      %v1282 = vpop.permute.xlu0 %1281
      %1283 = vrot.lane.b32.xlu0 %v1194, 4
      %v1284 = vpop.permute.xlu0 %1283
      %1315 = vst.msk [vmem:[%s1132] sm:$0xff] %vm715, %v1226
      %1316 = vst.msk [vmem:[%s1132 + $0x8] sm:$0xff] %vm715, %v1228
      %1317 = vst.msk [vmem:[%s1132 + $0x20] sm:$0xff] %vm715, %v1230
      %1318 = vst.msk [vmem:[%s1132 + $0x28] sm:$0xff] %vm715, %v1232
      %1319 = vst.msk [vmem:[%s1132 + $0x40] sm:$0xff] %vm715, %v1234
      %1320 = vst.msk [vmem:[%s1132 + $0x48] sm:$0xff] %vm715, %v1236
      %1321 = vst.msk [vmem:[%s1132 + $0x60] sm:$0xff] %vm715, %v1238
      %1322 = vst.msk [vmem:[%s1132 + $0x68] sm:$0xff] %vm715, %v1240
      %1323 = vst.msk [vmem:[%s1132 + $0x80] sm:$0xff] %vm715, %v1242
      %1324 = vst.msk [vmem:[%s1132 + $0x88] sm:$0xff] %vm715, %v1244
      %1325 = vst.msk [vmem:[%s1132 + $0xa0] sm:$0xff] %vm715, %v1246
      %1326 = vst.msk [vmem:[%s1132 + $0xa8] sm:$0xff] %vm715, %v1248
      %1327 = vst.msk [vmem:[%s1132 + $0xc0] sm:$0xff] %vm715, %v1250
      %1328 = vst.msk [vmem:[%s1132 + $0xc8] sm:$0xff] %vm715, %v1252
      %1329 = vst.msk [vmem:[%s1132 + $0xe0] sm:$0xff] %vm715, %v1254
      %1330 = vst.msk [vmem:[%s1132 + $0xe8] sm:$0xff] %vm715, %v1256
      %1331 = vst.msk [vmem:[%s1132 + $0x100] sm:$0xff] %vm715, %v1258
      %1332 = vst.msk [vmem:[%s1132 + $0x108] sm:$0xff] %vm715, %v1260
      %1333 = vst.msk [vmem:[%s1132 + $0x120] sm:$0xff] %vm715, %v1262
      %1334 = vst.msk [vmem:[%s1132 + $0x128] sm:$0xff] %vm715, %v1264
      %1335 = vst.msk [vmem:[%s1132 + $0x140] sm:$0xff] %vm715, %v1266
      %1336 = vst.msk [vmem:[%s1132 + $0x148] sm:$0xff] %vm715, %v1268
      %1337 = vst.msk [vmem:[%s1132 + $0x160] sm:$0xff] %vm715, %v1270
      %1338 = vst.msk [vmem:[%s1132 + $0x168] sm:$0xff] %vm715, %v1272
      %1339 = vst.msk [vmem:[%s1132 + $0x180] sm:$0xff] %vm715, %v1274
      %1340 = vst.msk [vmem:[%s1132 + $0x188] sm:$0xff] %vm715, %v1276
      %1341 = vst.msk [vmem:[%s1132 + $0x1a0] sm:$0xff] %vm715, %v1278
      %1342 = vst.msk [vmem:[%s1132 + $0x1a8] sm:$0xff] %vm715, %v1280
      %1343 = vst.msk [vmem:[%s1132 + $0x1c0] sm:$0xff] %vm715, %v1282
      %1344 = vst.msk [vmem:[%s1132 + $0x1c8] sm:$0xff] %vm715, %v1284
      %s1345 = smul.u32 16, %s18
      %p1346 = scmp.lt.s32.totalorder %s17, 1
      %s1347 = scalar_select %p1346, %s17, 1
      %p1348 = scmp.lt.s32.totalorder %s1345, 15
      %s1349 = scalar_select %p1348, %s1345, 15
      %s1350 = smul.addr %s1349, 4
      %s1351 = smul.addr %s1347, 64
      %s1352 = sadd.s32 %s1350, %s1351
      %s1353 = smul.addr %s1352, 8
      %s1354 = scalar_lea.vmem %s2, %s1353
      // Predicated region
      $region29: #{tpu_custom_call.1} parent=27 // pred_check
        %p1355 = pneg %p101
      $region30: #{tpu_custom_call.1} parent=27 // pred_check_branch
        %1357 = sbr.rel (%p1355) target = $region32
      $region31: #{tpu_custom_call.1} parent=27 // pred_region
        %s1358 = smul.u32 16, %s18
      $region32: #{tpu_custom_call.1} parent=27 // pred_fallthru
        _
    $region28: #{tpu_custom_call.1} parent=5 // pred_fallthru
      _
    %p1359 = scmp.le.s32.totalorder 2, %s8
    // Predicated region
    $region33: #{tpu_custom_call.1} parent=5 // pred_check
      %p1360 = pneg %p1359
    $region34: #{tpu_custom_call.1} parent=5 // pred_check_branch
      %1362 = sbr.rel (%p1360) target = $region36
    $region35: #{tpu_custom_call.1} parent=5 // pred_region
      %s1363 = ssub.s32 %s8, 2
      // Predicated region
      $region37: #{tpu_custom_call.1} parent=35 // pred_check
        %p1364 = pneg %p107
      $region38: #{tpu_custom_call.1} parent=35 // pred_check_branch
        %1366 = sbr.rel (%p1364) target = $region40
      $region39: #{tpu_custom_call.1} parent=35 // pred_region
        %s1367 = smul.u32 16, %s20
        %p1368 = scmp.lt.s32.totalorder %s19, 1
        %s1369 = scalar_select %p1368, %s19, 1
        %p1370 = scmp.lt.s32.totalorder %s1367, 15
        %s1371 = scalar_select %p1370, %s1367, 15
        %s1372 = smul.addr %s1371, 4
        %s1373 = smul.addr %s1369, 64
        %s1374 = sadd.s32 %s1372, %s1373
        %s1375 = smul.addr %s1374, 8
        %s1376 = scalar_lea.vmem %s2, %s1375
      $region40: #{tpu_custom_call.1} parent=35 // pred_fallthru
        _
    $region36: #{tpu_custom_call.1} parent=5 // pred_fallthru
      _
  $region6: #{tpu_custom_call.1} parent=0 // loop_footer
    %s12 = sadd.s32 1, %s8
  $region7: #{tpu_custom_call.1} parent=0 // loop_footer_branch
    %7 = sbr.rel target = $region3
  $region8: #{tpu_custom_call.1} parent=0 // loop_exit
    _

</llo_original>
